<compile_context>
chip_gen: v7x
topology: tpu7x:2x2x1
jax: 0.10.0
libtpu: 0.0.40
codegen_flags: <defaults>
</compile_context>

<pallas_src>
import jax
import jax.numpy as jnp
from jax.experimental import pallas as pl
from jax.experimental.pallas import tpu as pltpu

B = 2          # batch
BP = 8         # batch padded to a full sublane group
T = 8          # sequence length
H = 32         # hidden_layer_size
IN = 1         # input_size
OUT = 1        # output_size

VEC = 3 * H          # first row of the "vector" block inside the weight pack
NROWS = 3 * H + 8    # total rows of the weight pack (multiple of 8)


def lstm_kernel(x_ref,        # (T*BP, 1) f32, time-major, rows b>=B are zero
                wpack_ref,    # (NROWS, 8H) f32, packed weights (see pack_params)
                out_ref):     # (BP, 1) f32
    # ---- static, aligned views into the single packed weight array ---------
    rhs_fused = wpack_ref[0:2 * H, :]                      # (2H, 8H) [[whh0|wih1];[0|whh1]]
    wih0 = wpack_ref[2 * H:3 * H, 0:4 * H]                 # (H, 4H)
    b0 = wpack_ref[VEC + 0:VEC + 1, 0:4 * H]               # (1, 4H)
    bl1 = wpack_ref[VEC + 1:VEC + 2, 0:4 * H]              # (1, 4H)
    w1 = wpack_ref[VEC + 2:VEC + 3, 0:H]                   # (1, H)
    b1 = wpack_ref[VEC + 3:VEC + 4, 0:H]                   # (1, H)
    w2r = wpack_ref[VEC + 4:VEC + 5, 0:2 * H]              # (1, 2H)  linear_2 weight row
    b2 = wpack_ref[VEC + 5:VEC + 6, 0:1]                   # (1, 1)

    # ---- hoisted: linear_1 + ReLU + layer-0 input projection for all T -----
    x1 = jnp.maximum(x_ref[...] * w1 + b1, 0.0)            # (T*BP, H)
    gx0 = jnp.dot(x1, wih0, preferred_element_type=jnp.float32) + b0   # (T*BP, 4H)

    # Hoisted lane constants for the single-sigmoid cell:
    #   tanh(x) = 2*sigmoid(2x) - 1 on the "g" lanes, sigmoid elsewhere.
    lane = jax.lax.broadcasted_iota(jnp.int32, (BP, 4 * H), 1)
    g_mask = (lane >= 2 * H) & (lane < 3 * H)
    g_scale = jnp.where(g_mask, 2.0, 1.0).astype(jnp.float32)   # (BP, 4H)
    g_off = jnp.where(g_mask, 1.0, 0.0).astype(jnp.float32)     # (BP, 4H)

    def cell(gates, c):
        s = jax.nn.sigmoid(gates * g_scale)                 # single EUP pass
        act = s * g_scale - g_off                           # fix up g-lanes to tanh
        i = act[:, 0:H]
        f = act[:, H:2 * H]
        g = act[:, 2 * H:3 * H]
        o = act[:, 3 * H:4 * H]
        c_new = f * c + i * g
        h_new = o * jnp.tanh(c_new)
        return h_new, c_new

    z = jnp.zeros((BP, H), jnp.float32)
    h1, c0, c1 = z, z, z

    # t = 0 for layer 0: h0(-1) == 0, so the recurrent term vanishes.
    h0, c0 = cell(gx0[0:BP, :], c0)

    # Fully unrolled (T static): one fused recurrent matmul per step.
    for t in range(T):
        lhs = jnp.concatenate([h0, h1], axis=1)             # (BP, 2H) = [h0(t), h1(t-1)]
        rec = jnp.dot(lhs, rhs_fused,
                      preferred_element_type=jnp.float32)   # (BP, 8H)
        # Layer 1, step t.
        h1, c1 = cell(rec[:, 4 * H:8 * H] + bl1, c1)
        # Layer 0, step t+1 (its recurrent term came out of the same matmul).
        if t + 1 < T:
            gates0 = gx0[(t + 1) * BP:(t + 2) * BP, :] + rec[:, 0:4 * H]
            h0, c0 = cell(gates0, c0)

    # h_n.permute(1,0,2).reshape(B, -1) == concat([h_layer0, h_layer1], -1).
    # TODO(synk): nn.Dropout(0.2) is identity at inference; training-mode
    # stochastic dropout is not reproduced here.
    hcat = jnp.concatenate([h0, h1], axis=1)                 # (BP, 2H)
    # linear_2 as a lane-reduce (cheaper than an MXU matmul with N=1).
    out_ref[...] = jnp.sum(hcat * w2r, axis=1, keepdims=True) + b2      # (BP, 1)


def _vmem_spec():
    return pl.BlockSpec(memory_space=pltpu.MemorySpace.VMEM)


def lstm_model_forward(x, wpack):
    """x: (B, T, 1) f32 -> (B,) f32 (matches LSTMModel.forward)."""
    xb = x[..., 0].astype(jnp.float32)                       # (B, T)
    x_pad = jnp.zeros((BP, T), jnp.float32).at[:B, :].set(xb)
    # Time-major flatten: row t*BP + b holds x[b, t, 0]; padded rows are zero.
    x_flat = x_pad.T.reshape(T * BP, 1)
    # Everything (weights + activations) is a few tens of KiB -> a single
    # grid-less, fully VMEM-resident invocation with exactly two input DMAs.
    out = pl.pallas_call(
        lstm_kernel,
        out_shape=jax.ShapeDtypeStruct((BP, OUT), jnp.float32),
        in_specs=[_vmem_spec(), _vmem_spec()],
        out_specs=_vmem_spec(),
    )(x_flat, wpack)
    # predictions[:, -1]  (output_size == 1 so -1 == 0); drop batch padding.
    return out[:B, 0]


def init_params(key):
    ks = jax.random.split(key, 6)

    # linear_1: Linear(1, H), default PyTorch init U(-1/sqrt(in), 1/sqrt(in)).
    lim1 = 1.0
    w1 = jax.random.uniform(ks[0], (IN, H), jnp.float32, -lim1, lim1)   # (in, out)
    b1 = jax.random.uniform(ks[1], (1, H), jnp.float32, -lim1, lim1)

    def lstm_layer(k):
        ka, kb = jax.random.split(k)
        # weight_ih: kaiming_normal_, torch shape (4H, H) -> transpose to (H, 4H)
        w_ih = jax.random.normal(ka, (4 * H, H), jnp.float32) * jnp.sqrt(2.0 / H)
        # weight_hh: orthogonal_, torch shape (4H, H)
        q, _ = jnp.linalg.qr(jax.random.normal(kb, (4 * H, H), jnp.float32))
        # biases: zeros (b_ih + b_hh = 0)
        b = jnp.zeros((1, 4 * H), jnp.float32)
        return w_ih.T, q.T, b                                 # (H,4H), (H,4H), (1,4H)

    wih0, whh0, b0 = lstm_layer(ks[2])
    wih1, whh1, bl1 = lstm_layer(ks[3])

    # linear_2: Linear(2H, 1)
    lim2 = 1.0 / jnp.sqrt(2.0 * H)
    w2 = jax.random.uniform(ks[4], (2 * H, OUT), jnp.float32, -lim2, lim2)
    b2 = jax.random.uniform(ks[5], (1, OUT), jnp.float32, -lim2, lim2)

    return dict(w1=w1, b1=b1, wih0=wih0, whh0=whh0, b0=b0,
                wih1=wih1, whh1=whh1, bl1=bl1, w2=w2, b2=b2)


def pack_params(p):
    """Pack all weights into one (NROWS, 8H) f32 array with 8/128-aligned blocks."""
    # Fused recurrent RHS: cols 0:4H -> layer-0 gates (rows H:2H MUST stay zero
    # so h1 does not leak into layer-0), cols 4H:8H -> layer-1 gates.
    rhs = jnp.zeros((2 * H, 8 * H), jnp.float32)
    rhs = rhs.at[0:H, 0:4 * H].set(p["whh0"])
    rhs = rhs.at[0:H, 4 * H:8 * H].set(p["wih1"])
    rhs = rhs.at[H:2 * H, 4 * H:8 * H].set(p["whh1"])

    wpack = jnp.zeros((NROWS, 8 * H), jnp.float32)
    wpack = wpack.at[0:2 * H, :].set(rhs)
    wpack = wpack.at[2 * H:3 * H, 0:4 * H].set(p["wih0"])
    wpack = wpack.at[VEC + 0, 0:4 * H].set(p["b0"][0])
    wpack = wpack.at[VEC + 1, 0:4 * H].set(p["bl1"][0])
    wpack = wpack.at[VEC + 2, 0:H].set(p["w1"][0])
    wpack = wpack.at[VEC + 3, 0:H].set(p["b1"][0])
    wpack = wpack.at[VEC + 4, 0:2 * H].set(p["w2"][:, 0])
    wpack = wpack.at[VEC + 5, 0:1].set(p["b2"][0])
    return wpack


def reference_forward(x, p):
    """Pure-JAX reference with the module's semantics (unfused), for checking."""
    xb = x[..., 0].astype(jnp.float32)                                   # (B, T)
    x1 = jnp.maximum(xb[:, :, None] * p["w1"][None] + p["b1"][None], 0.0)  # (B,T,H)

    def cell(gates, c):
        i = jax.nn.sigmoid(gates[:, 0:H])
        f = jax.nn.sigmoid(gates[:, H:2 * H])
        g = jnp.tanh(gates[:, 2 * H:3 * H])
        o = jax.nn.sigmoid(gates[:, 3 * H:4 * H])
        c = f * c + i * g
        return o * jnp.tanh(c), c

    h0 = c0 = h1 = c1 = jnp.zeros((B, H), jnp.float32)
    for t in range(T):
        g0 = x1[:, t] @ p["wih0"] + h0 @ p["whh0"] + p["b0"]
        h0, c0 = cell(g0, c0)
        g1 = h0 @ p["wih1"] + h1 @ p["whh1"] + p["bl1"]
        h1, c1 = cell(g1, c1)
    hcat = jnp.concatenate([h0, h1], axis=1)
    pred = hcat @ p["w2"] + p["b2"]
    return pred[:, -1]


if __name__ == "__main__":
    key = jax.random.PRNGKey(0)
    kp, kx = jax.random.split(key)
    params = init_params(kp)
    wpack = pack_params(params)
    x = jax.random.normal(kx, (B, T, IN), jnp.float32)

    out = jax.block_until_ready(lstm_model_forward(x, wpack))
    ref = jax.block_until_ready(reference_forward(x, params))

    assert out.shape == (B,), out.shape
    assert jnp.allclose(out, ref, atol=1e-4, rtol=1e-4), (out, ref)
    print("KERNEL_OK")
</pallas_src>

<mosaic_0001>
module attributes {stable_mosaic.version = 11 : i64} {
  func.func @lstm_kernel(%arg0: memref<64x1xf32, #tpu.memory_space<vmem>>, %arg1: memref<104x256xf32, #tpu.memory_space<vmem>>, %arg2: memref<8x1xf32, #tpu.memory_space<vmem>>) attributes {dimension_semantics = [], scalar_prefetch = 0 : i64, scratch_operands = 0 : i64, tpu.core_type = #tpu.core_type<tc>} {
    %c0 = arith.constant 0 : index
    %c0_0 = arith.constant 0 : index
    %0 = vector.load %arg1[%c0, %c0_0] : memref<104x256xf32, #tpu.memory_space<vmem>>, vector<64x256xf32>
    %c64 = arith.constant 64 : index
    %c0_1 = arith.constant 0 : index
    %1 = vector.load %arg1[%c64, %c0_1] : memref<104x256xf32, #tpu.memory_space<vmem>>, vector<32x128xf32>
    %c96 = arith.constant 96 : index
    %c0_2 = arith.constant 0 : index
    %2 = vector.load %arg1[%c96, %c0_2] : memref<104x256xf32, #tpu.memory_space<vmem>>, vector<1x128xf32>
    %c97 = arith.constant 97 : index
    %c0_3 = arith.constant 0 : index
    %3 = vector.load %arg1[%c97, %c0_3] : memref<104x256xf32, #tpu.memory_space<vmem>>, vector<1x128xf32>
    %c98 = arith.constant 98 : index
    %c0_4 = arith.constant 0 : index
    %4 = vector.load %arg1[%c98, %c0_4] : memref<104x256xf32, #tpu.memory_space<vmem>>, vector<1x32xf32>
    %c99 = arith.constant 99 : index
    %c0_5 = arith.constant 0 : index
    %5 = vector.load %arg1[%c99, %c0_5] : memref<104x256xf32, #tpu.memory_space<vmem>>, vector<1x32xf32>
    %c100 = arith.constant 100 : index
    %c0_6 = arith.constant 0 : index
    %6 = vector.load %arg1[%c100, %c0_6] : memref<104x256xf32, #tpu.memory_space<vmem>>, vector<1x64xf32>
    %c101 = arith.constant 101 : index
    %c0_7 = arith.constant 0 : index
    %7 = vector.load %arg1[%c101, %c0_7] : memref<104x256xf32, #tpu.memory_space<vmem>>, vector<1x1xf32>
    %c0_8 = arith.constant 0 : index
    %c0_9 = arith.constant 0 : index
    %8 = vector.load %arg0[%c0_8, %c0_9] : memref<64x1xf32, #tpu.memory_space<vmem>>, vector<64x1xf32>
    %9 = vector.broadcast %8 : vector<64x1xf32> to vector<64x32xf32>
    %10 = vector.broadcast %4 : vector<1x32xf32> to vector<64x32xf32>
    %11 = arith.mulf %9, %10 : vector<64x32xf32>
    %12 = vector.broadcast %5 : vector<1x32xf32> to vector<64x32xf32>
    %13 = arith.addf %11, %12 : vector<64x32xf32>
    %cst = arith.constant 0.000000e+00 : f32
    %14 = vector.broadcast %cst : f32 to vector<64x32xf32>
    %15 = arith.maximumf %13, %14 : vector<64x32xf32>
    %cst_10 = arith.constant dense<0.000000e+00> : vector<64x128xf32>
    %16 = tpu.matmul %15, %1, %cst_10 {dimension_numbers = #tpu.dot_dimension_numbers<[1], [0], [0], [1], [0, 0, 1, 1], [], []>} : vector<64x32xf32>, vector<32x128xf32>, vector<64x128xf32> -> vector<64x128xf32>
    %17 = vector.broadcast %2 : vector<1x128xf32> to vector<64x128xf32>
    %18 = arith.addf %16, %17 : vector<64x128xf32>
    %19 = tpu.iota {dimensions = array<i32: 1>} : vector<8x128xi32>
    %c64_i32 = arith.constant 64 : i32
    %20 = vector.broadcast %c64_i32 : i32 to vector<8x128xi32>
    %21 = arith.cmpi sge, %19, %20 : vector<8x128xi32>
    %c96_i32 = arith.constant 96 : i32
    %22 = vector.broadcast %c96_i32 : i32 to vector<8x128xi32>
    %23 = arith.cmpi slt, %19, %22 : vector<8x128xi32>
    %24 = arith.andi %21, %23 : vector<8x128xi1>
    %cst_11 = arith.constant 2.000000e+00 : f32
    %cst_12 = arith.constant 1.000000e+00 : f32
    %25 = vector.broadcast %cst_11 : f32 to vector<8x128xf32>
    %26 = vector.broadcast %cst_12 : f32 to vector<8x128xf32>
    %27 = arith.select %24, %25, %26 : vector<8x128xi1>, vector<8x128xf32>
    %cst_13 = arith.constant 1.000000e+00 : f32
    %cst_14 = arith.constant 0.000000e+00 : f32
    %28 = vector.broadcast %cst_13 : f32 to vector<8x128xf32>
    %29 = vector.broadcast %cst_14 : f32 to vector<8x128xf32>
    %30 = arith.select %24, %28, %29 : vector<8x128xi1>, vector<8x128xf32>
    %cst_15 = arith.constant 0.000000e+00 : f32
    %31 = vector.broadcast %cst_15 : f32 to vector<8x32xf32>
    %32 = vector.extract_strided_slice %18 {offsets = [0, 0], sizes = [8, 128], strides = [1, 1]} : vector<64x128xf32> to vector<8x128xf32>
    %33 = arith.mulf %32, %27 : vector<8x128xf32>
    %34 = arith.negf %33 : vector<8x128xf32>
    %35 = math.exp %34 : vector<8x128xf32>
    %cst_16 = arith.constant 1.000000e+00 : f32
    %36 = vector.broadcast %cst_16 : f32 to vector<8x128xf32>
    %37 = arith.addf %36, %35 : vector<8x128xf32>
    %38 = arith.divf %36, %37 : vector<8x128xf32>
    %39 = arith.mulf %38, %27 : vector<8x128xf32>
    %40 = arith.subf %39, %30 : vector<8x128xf32>
    %41 = vector.extract_strided_slice %40 {offsets = [0, 0], sizes = [8, 32], strides = [1, 1]} : vector<8x128xf32> to vector<8x32xf32>
    %42 = vector.extract_strided_slice %40 {offsets = [0, 32], sizes = [8, 32], strides = [1, 1]} : vector<8x128xf32> to vector<8x32xf32>
    %43 = vector.extract_strided_slice %40 {offsets = [0, 64], sizes = [8, 32], strides = [1, 1]} : vector<8x128xf32> to vector<8x32xf32>
    %44 = vector.extract_strided_slice %40 {offsets = [0, 96], sizes = [8, 32], strides = [1, 1]} : vector<8x128xf32> to vector<8x32xf32>
    %45 = arith.mulf %42, %31 : vector<8x32xf32>
    %46 = arith.mulf %41, %43 : vector<8x32xf32>
    %47 = arith.addf %45, %46 : vector<8x32xf32>
    %48 = math.tanh %47 : vector<8x32xf32>
    %49 = arith.mulf %44, %48 : vector<8x32xf32>
    %50 = tpu.concatenate %49, %31 in 1 : vector<8x32xf32>, vector<8x32xf32> -> vector<8x64xf32>
    %cst_17 = arith.constant dense<0.000000e+00> : vector<8x256xf32>
    %51 = tpu.matmul %50, %0, %cst_17 {dimension_numbers = #tpu.dot_dimension_numbers<[1], [0], [0], [1], [0, 0, 1, 1], [], []>} : vector<8x64xf32>, vector<64x256xf32>, vector<8x256xf32> -> vector<8x256xf32>
    %52 = vector.extract_strided_slice %51 {offsets = [0, 128], sizes = [8, 128], strides = [1, 1]} : vector<8x256xf32> to vector<8x128xf32>
    %53 = vector.broadcast %3 : vector<1x128xf32> to vector<8x128xf32>
    %54 = arith.addf %52, %53 : vector<8x128xf32>
    %55 = arith.mulf %54, %27 : vector<8x128xf32>
    %56 = arith.negf %55 : vector<8x128xf32>
    %57 = math.exp %56 : vector<8x128xf32>
    %cst_18 = arith.constant 1.000000e+00 : f32
    %58 = vector.broadcast %cst_18 : f32 to vector<8x128xf32>
    %59 = arith.addf %58, %57 : vector<8x128xf32>
    %60 = arith.divf %58, %59 : vector<8x128xf32>
    %61 = arith.mulf %60, %27 : vector<8x128xf32>
    %62 = arith.subf %61, %30 : vector<8x128xf32>
    %63 = vector.extract_strided_slice %62 {offsets = [0, 0], sizes = [8, 32], strides = [1, 1]} : vector<8x128xf32> to vector<8x32xf32>
    %64 = vector.extract_strided_slice %62 {offsets = [0, 32], sizes = [8, 32], strides = [1, 1]} : vector<8x128xf32> to vector<8x32xf32>
    %65 = vector.extract_strided_slice %62 {offsets = [0, 64], sizes = [8, 32], strides = [1, 1]} : vector<8x128xf32> to vector<8x32xf32>
    %66 = vector.extract_strided_slice %62 {offsets = [0, 96], sizes = [8, 32], strides = [1, 1]} : vector<8x128xf32> to vector<8x32xf32>
    %67 = arith.mulf %64, %31 : vector<8x32xf32>
    %68 = arith.mulf %63, %65 : vector<8x32xf32>
    %69 = arith.addf %67, %68 : vector<8x32xf32>
    %70 = math.tanh %69 : vector<8x32xf32>
    %71 = arith.mulf %66, %70 : vector<8x32xf32>
    %72 = vector.extract_strided_slice %18 {offsets = [8, 0], sizes = [8, 128], strides = [1, 1]} : vector<64x128xf32> to vector<8x128xf32>
    %73 = vector.extract_strided_slice %51 {offsets = [0, 0], sizes = [8, 128], strides = [1, 1]} : vector<8x256xf32> to vector<8x128xf32>
    %74 = arith.addf %72, %73 : vector<8x128xf32>
    %75 = arith.mulf %74, %27 : vector<8x128xf32>
    %76 = arith.negf %75 : vector<8x128xf32>
    %77 = math.exp %76 : vector<8x128xf32>
    %cst_19 = arith.constant 1.000000e+00 : f32
    %78 = vector.broadcast %cst_19 : f32 to vector<8x128xf32>
    %79 = arith.addf %78, %77 : vector<8x128xf32>
    %80 = arith.divf %78, %79 : vector<8x128xf32>
    %81 = arith.mulf %80, %27 : vector<8x128xf32>
    %82 = arith.subf %81, %30 : vector<8x128xf32>
    %83 = vector.extract_strided_slice %82 {offsets = [0, 0], sizes = [8, 32], strides = [1, 1]} : vector<8x128xf32> to vector<8x32xf32>
    %84 = vector.extract_strided_slice %82 {offsets = [0, 32], sizes = [8, 32], strides = [1, 1]} : vector<8x128xf32> to vector<8x32xf32>
    %85 = vector.extract_strided_slice %82 {offsets = [0, 64], sizes = [8, 32], strides = [1, 1]} : vector<8x128xf32> to vector<8x32xf32>
    %86 = vector.extract_strided_slice %82 {offsets = [0, 96], sizes = [8, 32], strides = [1, 1]} : vector<8x128xf32> to vector<8x32xf32>
    %87 = arith.mulf %84, %47 : vector<8x32xf32>
    %88 = arith.mulf %83, %85 : vector<8x32xf32>
    %89 = arith.addf %87, %88 : vector<8x32xf32>
    %90 = math.tanh %89 : vector<8x32xf32>
    %91 = arith.mulf %86, %90 : vector<8x32xf32>
    %92 = tpu.concatenate %91, %71 in 1 : vector<8x32xf32>, vector<8x32xf32> -> vector<8x64xf32>
    %cst_20 = arith.constant dense<0.000000e+00> : vector<8x256xf32>
    %93 = tpu.matmul %92, %0, %cst_20 {dimension_numbers = #tpu.dot_dimension_numbers<[1], [0], [0], [1], [0, 0, 1, 1], [], []>} : vector<8x64xf32>, vector<64x256xf32>, vector<8x256xf32> -> vector<8x256xf32>
    %94 = vector.extract_strided_slice %93 {offsets = [0, 128], sizes = [8, 128], strides = [1, 1]} : vector<8x256xf32> to vector<8x128xf32>
    %95 = vector.broadcast %3 : vector<1x128xf32> to vector<8x128xf32>
    %96 = arith.addf %94, %95 : vector<8x128xf32>
    %97 = arith.mulf %96, %27 : vector<8x128xf32>
    %98 = arith.negf %97 : vector<8x128xf32>
    %99 = math.exp %98 : vector<8x128xf32>
    %cst_21 = arith.constant 1.000000e+00 : f32
    %100 = vector.broadcast %cst_21 : f32 to vector<8x128xf32>
    %101 = arith.addf %100, %99 : vector<8x128xf32>
    %102 = arith.divf %100, %101 : vector<8x128xf32>
    %103 = arith.mulf %102, %27 : vector<8x128xf32>
    %104 = arith.subf %103, %30 : vector<8x128xf32>
    %105 = vector.extract_strided_slice %104 {offsets = [0, 0], sizes = [8, 32], strides = [1, 1]} : vector<8x128xf32> to vector<8x32xf32>
    %106 = vector.extract_strided_slice %104 {offsets = [0, 32], sizes = [8, 32], strides = [1, 1]} : vector<8x128xf32> to vector<8x32xf32>
    %107 = vector.extract_strided_slice %104 {offsets = [0, 64], sizes = [8, 32], strides = [1, 1]} : vector<8x128xf32> to vector<8x32xf32>
    %108 = vector.extract_strided_slice %104 {offsets = [0, 96], sizes = [8, 32], strides = [1, 1]} : vector<8x128xf32> to vector<8x32xf32>
    %109 = arith.mulf %106, %69 : vector<8x32xf32>
    %110 = arith.mulf %105, %107 : vector<8x32xf32>
    %111 = arith.addf %109, %110 : vector<8x32xf32>
    %112 = math.tanh %111 : vector<8x32xf32>
    %113 = arith.mulf %108, %112 : vector<8x32xf32>
    %114 = vector.extract_strided_slice %18 {offsets = [16, 0], sizes = [8, 128], strides = [1, 1]} : vector<64x128xf32> to vector<8x128xf32>
    %115 = vector.extract_strided_slice %93 {offsets = [0, 0], sizes = [8, 128], strides = [1, 1]} : vector<8x256xf32> to vector<8x128xf32>
    %116 = arith.addf %114, %115 : vector<8x128xf32>
    %117 = arith.mulf %116, %27 : vector<8x128xf32>
    %118 = arith.negf %117 : vector<8x128xf32>
    %119 = math.exp %118 : vector<8x128xf32>
    %cst_22 = arith.constant 1.000000e+00 : f32
    %120 = vector.broadcast %cst_22 : f32 to vector<8x128xf32>
    %121 = arith.addf %120, %119 : vector<8x128xf32>
    %122 = arith.divf %120, %121 : vector<8x128xf32>
    %123 = arith.mulf %122, %27 : vector<8x128xf32>
    %124 = arith.subf %123, %30 : vector<8x128xf32>
    %125 = vector.extract_strided_slice %124 {offsets = [0, 0], sizes = [8, 32], strides = [1, 1]} : vector<8x128xf32> to vector<8x32xf32>
    %126 = vector.extract_strided_slice %124 {offsets = [0, 32], sizes = [8, 32], strides = [1, 1]} : vector<8x128xf32> to vector<8x32xf32>
    %127 = vector.extract_strided_slice %124 {offsets = [0, 64], sizes = [8, 32], strides = [1, 1]} : vector<8x128xf32> to vector<8x32xf32>
    %128 = vector.extract_strided_slice %124 {offsets = [0, 96], sizes = [8, 32], strides = [1, 1]} : vector<8x128xf32> to vector<8x32xf32>
    %129 = arith.mulf %126, %89 : vector<8x32xf32>
    %130 = arith.mulf %125, %127 : vector<8x32xf32>
    %131 = arith.addf %129, %130 : vector<8x32xf32>
    %132 = math.tanh %131 : vector<8x32xf32>
    %133 = arith.mulf %128, %132 : vector<8x32xf32>
    %134 = tpu.concatenate %133, %113 in 1 : vector<8x32xf32>, vector<8x32xf32> -> vector<8x64xf32>
    %cst_23 = arith.constant dense<0.000000e+00> : vector<8x256xf32>
    %135 = tpu.matmul %134, %0, %cst_23 {dimension_numbers = #tpu.dot_dimension_numbers<[1], [0], [0], [1], [0, 0, 1, 1], [], []>} : vector<8x64xf32>, vector<64x256xf32>, vector<8x256xf32> -> vector<8x256xf32>
    %136 = vector.extract_strided_slice %135 {offsets = [0, 128], sizes = [8, 128], strides = [1, 1]} : vector<8x256xf32> to vector<8x128xf32>
    %137 = vector.broadcast %3 : vector<1x128xf32> to vector<8x128xf32>
    %138 = arith.addf %136, %137 : vector<8x128xf32>
    %139 = arith.mulf %138, %27 : vector<8x128xf32>
    %140 = arith.negf %139 : vector<8x128xf32>
    %141 = math.exp %140 : vector<8x128xf32>
    %cst_24 = arith.constant 1.000000e+00 : f32
    %142 = vector.broadcast %cst_24 : f32 to vector<8x128xf32>
    %143 = arith.addf %142, %141 : vector<8x128xf32>
    %144 = arith.divf %142, %143 : vector<8x128xf32>
    %145 = arith.mulf %144, %27 : vector<8x128xf32>
    %146 = arith.subf %145, %30 : vector<8x128xf32>
    %147 = vector.extract_strided_slice %146 {offsets = [0, 0], sizes = [8, 32], strides = [1, 1]} : vector<8x128xf32> to vector<8x32xf32>
    %148 = vector.extract_strided_slice %146 {offsets = [0, 32], sizes = [8, 32], strides = [1, 1]} : vector<8x128xf32> to vector<8x32xf32>
    %149 = vector.extract_strided_slice %146 {offsets = [0, 64], sizes = [8, 32], strides = [1, 1]} : vector<8x128xf32> to vector<8x32xf32>
    %150 = vector.extract_strided_slice %146 {offsets = [0, 96], sizes = [8, 32], strides = [1, 1]} : vector<8x128xf32> to vector<8x32xf32>
    %151 = arith.mulf %148, %111 : vector<8x32xf32>
    %152 = arith.mulf %147, %149 : vector<8x32xf32>
    %153 = arith.addf %151, %152 : vector<8x32xf32>
    %154 = math.tanh %153 : vector<8x32xf32>
    %155 = arith.mulf %150, %154 : vector<8x32xf32>
    %156 = vector.extract_strided_slice %18 {offsets = [24, 0], sizes = [8, 128], strides = [1, 1]} : vector<64x128xf32> to vector<8x128xf32>
    %157 = vector.extract_strided_slice %135 {offsets = [0, 0], sizes = [8, 128], strides = [1, 1]} : vector<8x256xf32> to vector<8x128xf32>
    %158 = arith.addf %156, %157 : vector<8x128xf32>
    %159 = arith.mulf %158, %27 : vector<8x128xf32>
    %160 = arith.negf %159 : vector<8x128xf32>
    %161 = math.exp %160 : vector<8x128xf32>
    %cst_25 = arith.constant 1.000000e+00 : f32
    %162 = vector.broadcast %cst_25 : f32 to vector<8x128xf32>
    %163 = arith.addf %162, %161 : vector<8x128xf32>
    %164 = arith.divf %162, %163 : vector<8x128xf32>
    %165 = arith.mulf %164, %27 : vector<8x128xf32>
    %166 = arith.subf %165, %30 : vector<8x128xf32>
    %167 = vector.extract_strided_slice %166 {offsets = [0, 0], sizes = [8, 32], strides = [1, 1]} : vector<8x128xf32> to vector<8x32xf32>
    %168 = vector.extract_strided_slice %166 {offsets = [0, 32], sizes = [8, 32], strides = [1, 1]} : vector<8x128xf32> to vector<8x32xf32>
    %169 = vector.extract_strided_slice %166 {offsets = [0, 64], sizes = [8, 32], strides = [1, 1]} : vector<8x128xf32> to vector<8x32xf32>
    %170 = vector.extract_strided_slice %166 {offsets = [0, 96], sizes = [8, 32], strides = [1, 1]} : vector<8x128xf32> to vector<8x32xf32>
    %171 = arith.mulf %168, %131 : vector<8x32xf32>
    %172 = arith.mulf %167, %169 : vector<8x32xf32>
    %173 = arith.addf %171, %172 : vector<8x32xf32>
    %174 = math.tanh %173 : vector<8x32xf32>
    %175 = arith.mulf %170, %174 : vector<8x32xf32>
    %176 = tpu.concatenate %175, %155 in 1 : vector<8x32xf32>, vector<8x32xf32> -> vector<8x64xf32>
    %cst_26 = arith.constant dense<0.000000e+00> : vector<8x256xf32>
    %177 = tpu.matmul %176, %0, %cst_26 {dimension_numbers = #tpu.dot_dimension_numbers<[1], [0], [0], [1], [0, 0, 1, 1], [], []>} : vector<8x64xf32>, vector<64x256xf32>, vector<8x256xf32> -> vector<8x256xf32>
    %178 = vector.extract_strided_slice %177 {offsets = [0, 128], sizes = [8, 128], strides = [1, 1]} : vector<8x256xf32> to vector<8x128xf32>
    %179 = vector.broadcast %3 : vector<1x128xf32> to vector<8x128xf32>
    %180 = arith.addf %178, %179 : vector<8x128xf32>
    %181 = arith.mulf %180, %27 : vector<8x128xf32>
    %182 = arith.negf %181 : vector<8x128xf32>
    %183 = math.exp %182 : vector<8x128xf32>
    %cst_27 = arith.constant 1.000000e+00 : f32
    %184 = vector.broadcast %cst_27 : f32 to vector<8x128xf32>
    %185 = arith.addf %184, %183 : vector<8x128xf32>
    %186 = arith.divf %184, %185 : vector<8x128xf32>
    %187 = arith.mulf %186, %27 : vector<8x128xf32>
    %188 = arith.subf %187, %30 : vector<8x128xf32>
    %189 = vector.extract_strided_slice %188 {offsets = [0, 0], sizes = [8, 32], strides = [1, 1]} : vector<8x128xf32> to vector<8x32xf32>
    %190 = vector.extract_strided_slice %188 {offsets = [0, 32], sizes = [8, 32], strides = [1, 1]} : vector<8x128xf32> to vector<8x32xf32>
    %191 = vector.extract_strided_slice %188 {offsets = [0, 64], sizes = [8, 32], strides = [1, 1]} : vector<8x128xf32> to vector<8x32xf32>
    %192 = vector.extract_strided_slice %188 {offsets = [0, 96], sizes = [8, 32], strides = [1, 1]} : vector<8x128xf32> to vector<8x32xf32>
    %193 = arith.mulf %190, %153 : vector<8x32xf32>
    %194 = arith.mulf %189, %191 : vector<8x32xf32>
    %195 = arith.addf %193, %194 : vector<8x32xf32>
    %196 = math.tanh %195 : vector<8x32xf32>
    %197 = arith.mulf %192, %196 : vector<8x32xf32>
    %198 = vector.extract_strided_slice %18 {offsets = [32, 0], sizes = [8, 128], strides = [1, 1]} : vector<64x128xf32> to vector<8x128xf32>
    %199 = vector.extract_strided_slice %177 {offsets = [0, 0], sizes = [8, 128], strides = [1, 1]} : vector<8x256xf32> to vector<8x128xf32>
    %200 = arith.addf %198, %199 : vector<8x128xf32>
    %201 = arith.mulf %200, %27 : vector<8x128xf32>
    %202 = arith.negf %201 : vector<8x128xf32>
    %203 = math.exp %202 : vector<8x128xf32>
    %cst_28 = arith.constant 1.000000e+00 : f32
    %204 = vector.broadcast %cst_28 : f32 to vector<8x128xf32>
    %205 = arith.addf %204, %203 : vector<8x128xf32>
    %206 = arith.divf %204, %205 : vector<8x128xf32>
    %207 = arith.mulf %206, %27 : vector<8x128xf32>
    %208 = arith.subf %207, %30 : vector<8x128xf32>
    %209 = vector.extract_strided_slice %208 {offsets = [0, 0], sizes = [8, 32], strides = [1, 1]} : vector<8x128xf32> to vector<8x32xf32>
    %210 = vector.extract_strided_slice %208 {offsets = [0, 32], sizes = [8, 32], strides = [1, 1]} : vector<8x128xf32> to vector<8x32xf32>
    %211 = vector.extract_strided_slice %208 {offsets = [0, 64], sizes = [8, 32], strides = [1, 1]} : vector<8x128xf32> to vector<8x32xf32>
    %212 = vector.extract_strided_slice %208 {offsets = [0, 96], sizes = [8, 32], strides = [1, 1]} : vector<8x128xf32> to vector<8x32xf32>
    %213 = arith.mulf %210, %173 : vector<8x32xf32>
    %214 = arith.mulf %209, %211 : vector<8x32xf32>
    %215 = arith.addf %213, %214 : vector<8x32xf32>
    %216 = math.tanh %215 : vector<8x32xf32>
    %217 = arith.mulf %212, %216 : vector<8x32xf32>
    %218 = tpu.concatenate %217, %197 in 1 : vector<8x32xf32>, vector<8x32xf32> -> vector<8x64xf32>
    %cst_29 = arith.constant dense<0.000000e+00> : vector<8x256xf32>
    %219 = tpu.matmul %218, %0, %cst_29 {dimension_numbers = #tpu.dot_dimension_numbers<[1], [0], [0], [1], [0, 0, 1, 1], [], []>} : vector<8x64xf32>, vector<64x256xf32>, vector<8x256xf32> -> vector<8x256xf32>
    %220 = vector.extract_strided_slice %219 {offsets = [0, 128], sizes = [8, 128], strides = [1, 1]} : vector<8x256xf32> to vector<8x128xf32>
    %221 = vector.broadcast %3 : vector<1x128xf32> to vector<8x128xf32>
    %222 = arith.addf %220, %221 : vector<8x128xf32>
    %223 = arith.mulf %222, %27 : vector<8x128xf32>
    %224 = arith.negf %223 : vector<8x128xf32>
    %225 = math.exp %224 : vector<8x128xf32>
    %cst_30 = arith.constant 1.000000e+00 : f32
    %226 = vector.broadcast %cst_30 : f32 to vector<8x128xf32>
    %227 = arith.addf %226, %225 : vector<8x128xf32>
    %228 = arith.divf %226, %227 : vector<8x128xf32>
    %229 = arith.mulf %228, %27 : vector<8x128xf32>
    %230 = arith.subf %229, %30 : vector<8x128xf32>
    %231 = vector.extract_strided_slice %230 {offsets = [0, 0], sizes = [8, 32], strides = [1, 1]} : vector<8x128xf32> to vector<8x32xf32>
    %232 = vector.extract_strided_slice %230 {offsets = [0, 32], sizes = [8, 32], strides = [1, 1]} : vector<8x128xf32> to vector<8x32xf32>
    %233 = vector.extract_strided_slice %230 {offsets = [0, 64], sizes = [8, 32], strides = [1, 1]} : vector<8x128xf32> to vector<8x32xf32>
    %234 = vector.extract_strided_slice %230 {offsets = [0, 96], sizes = [8, 32], strides = [1, 1]} : vector<8x128xf32> to vector<8x32xf32>
    %235 = arith.mulf %232, %195 : vector<8x32xf32>
    %236 = arith.mulf %231, %233 : vector<8x32xf32>
    %237 = arith.addf %235, %236 : vector<8x32xf32>
    %238 = math.tanh %237 : vector<8x32xf32>
    %239 = arith.mulf %234, %238 : vector<8x32xf32>
    %240 = vector.extract_strided_slice %18 {offsets = [40, 0], sizes = [8, 128], strides = [1, 1]} : vector<64x128xf32> to vector<8x128xf32>
    %241 = vector.extract_strided_slice %219 {offsets = [0, 0], sizes = [8, 128], strides = [1, 1]} : vector<8x256xf32> to vector<8x128xf32>
    %242 = arith.addf %240, %241 : vector<8x128xf32>
    %243 = arith.mulf %242, %27 : vector<8x128xf32>
    %244 = arith.negf %243 : vector<8x128xf32>
    %245 = math.exp %244 : vector<8x128xf32>
    %cst_31 = arith.constant 1.000000e+00 : f32
    %246 = vector.broadcast %cst_31 : f32 to vector<8x128xf32>
    %247 = arith.addf %246, %245 : vector<8x128xf32>
    %248 = arith.divf %246, %247 : vector<8x128xf32>
    %249 = arith.mulf %248, %27 : vector<8x128xf32>
    %250 = arith.subf %249, %30 : vector<8x128xf32>
    %251 = vector.extract_strided_slice %250 {offsets = [0, 0], sizes = [8, 32], strides = [1, 1]} : vector<8x128xf32> to vector<8x32xf32>
    %252 = vector.extract_strided_slice %250 {offsets = [0, 32], sizes = [8, 32], strides = [1, 1]} : vector<8x128xf32> to vector<8x32xf32>
    %253 = vector.extract_strided_slice %250 {offsets = [0, 64], sizes = [8, 32], strides = [1, 1]} : vector<8x128xf32> to vector<8x32xf32>
    %254 = vector.extract_strided_slice %250 {offsets = [0, 96], sizes = [8, 32], strides = [1, 1]} : vector<8x128xf32> to vector<8x32xf32>
    %255 = arith.mulf %252, %215 : vector<8x32xf32>
    %256 = arith.mulf %251, %253 : vector<8x32xf32>
    %257 = arith.addf %255, %256 : vector<8x32xf32>
    %258 = math.tanh %257 : vector<8x32xf32>
    %259 = arith.mulf %254, %258 : vector<8x32xf32>
    %260 = tpu.concatenate %259, %239 in 1 : vector<8x32xf32>, vector<8x32xf32> -> vector<8x64xf32>
    %cst_32 = arith.constant dense<0.000000e+00> : vector<8x256xf32>
    %261 = tpu.matmul %260, %0, %cst_32 {dimension_numbers = #tpu.dot_dimension_numbers<[1], [0], [0], [1], [0, 0, 1, 1], [], []>} : vector<8x64xf32>, vector<64x256xf32>, vector<8x256xf32> -> vector<8x256xf32>
    %262 = vector.extract_strided_slice %261 {offsets = [0, 128], sizes = [8, 128], strides = [1, 1]} : vector<8x256xf32> to vector<8x128xf32>
    %263 = vector.broadcast %3 : vector<1x128xf32> to vector<8x128xf32>
    %264 = arith.addf %262, %263 : vector<8x128xf32>
    %265 = arith.mulf %264, %27 : vector<8x128xf32>
    %266 = arith.negf %265 : vector<8x128xf32>
    %267 = math.exp %266 : vector<8x128xf32>
    %cst_33 = arith.constant 1.000000e+00 : f32
    %268 = vector.broadcast %cst_33 : f32 to vector<8x128xf32>
    %269 = arith.addf %268, %267 : vector<8x128xf32>
    %270 = arith.divf %268, %269 : vector<8x128xf32>
    %271 = arith.mulf %270, %27 : vector<8x128xf32>
    %272 = arith.subf %271, %30 : vector<8x128xf32>
    %273 = vector.extract_strided_slice %272 {offsets = [0, 0], sizes = [8, 32], strides = [1, 1]} : vector<8x128xf32> to vector<8x32xf32>
    %274 = vector.extract_strided_slice %272 {offsets = [0, 32], sizes = [8, 32], strides = [1, 1]} : vector<8x128xf32> to vector<8x32xf32>
    %275 = vector.extract_strided_slice %272 {offsets = [0, 64], sizes = [8, 32], strides = [1, 1]} : vector<8x128xf32> to vector<8x32xf32>
    %276 = vector.extract_strided_slice %272 {offsets = [0, 96], sizes = [8, 32], strides = [1, 1]} : vector<8x128xf32> to vector<8x32xf32>
    %277 = arith.mulf %274, %237 : vector<8x32xf32>
    %278 = arith.mulf %273, %275 : vector<8x32xf32>
    %279 = arith.addf %277, %278 : vector<8x32xf32>
    %280 = math.tanh %279 : vector<8x32xf32>
    %281 = arith.mulf %276, %280 : vector<8x32xf32>
    %282 = vector.extract_strided_slice %18 {offsets = [48, 0], sizes = [8, 128], strides = [1, 1]} : vector<64x128xf32> to vector<8x128xf32>
    %283 = vector.extract_strided_slice %261 {offsets = [0, 0], sizes = [8, 128], strides = [1, 1]} : vector<8x256xf32> to vector<8x128xf32>
    %284 = arith.addf %282, %283 : vector<8x128xf32>
    %285 = arith.mulf %284, %27 : vector<8x128xf32>
    %286 = arith.negf %285 : vector<8x128xf32>
    %287 = math.exp %286 : vector<8x128xf32>
    %cst_34 = arith.constant 1.000000e+00 : f32
    %288 = vector.broadcast %cst_34 : f32 to vector<8x128xf32>
    %289 = arith.addf %288, %287 : vector<8x128xf32>
    %290 = arith.divf %288, %289 : vector<8x128xf32>
    %291 = arith.mulf %290, %27 : vector<8x128xf32>
    %292 = arith.subf %291, %30 : vector<8x128xf32>
    %293 = vector.extract_strided_slice %292 {offsets = [0, 0], sizes = [8, 32], strides = [1, 1]} : vector<8x128xf32> to vector<8x32xf32>
    %294 = vector.extract_strided_slice %292 {offsets = [0, 32], sizes = [8, 32], strides = [1, 1]} : vector<8x128xf32> to vector<8x32xf32>
    %295 = vector.extract_strided_slice %292 {offsets = [0, 64], sizes = [8, 32], strides = [1, 1]} : vector<8x128xf32> to vector<8x32xf32>
    %296 = vector.extract_strided_slice %292 {offsets = [0, 96], sizes = [8, 32], strides = [1, 1]} : vector<8x128xf32> to vector<8x32xf32>
    %297 = arith.mulf %294, %257 : vector<8x32xf32>
    %298 = arith.mulf %293, %295 : vector<8x32xf32>
    %299 = arith.addf %297, %298 : vector<8x32xf32>
    %300 = math.tanh %299 : vector<8x32xf32>
    %301 = arith.mulf %296, %300 : vector<8x32xf32>
    %302 = tpu.concatenate %301, %281 in 1 : vector<8x32xf32>, vector<8x32xf32> -> vector<8x64xf32>
    %cst_35 = arith.constant dense<0.000000e+00> : vector<8x256xf32>
    %303 = tpu.matmul %302, %0, %cst_35 {dimension_numbers = #tpu.dot_dimension_numbers<[1], [0], [0], [1], [0, 0, 1, 1], [], []>} : vector<8x64xf32>, vector<64x256xf32>, vector<8x256xf32> -> vector<8x256xf32>
    %304 = vector.extract_strided_slice %303 {offsets = [0, 128], sizes = [8, 128], strides = [1, 1]} : vector<8x256xf32> to vector<8x128xf32>
    %305 = vector.broadcast %3 : vector<1x128xf32> to vector<8x128xf32>
    %306 = arith.addf %304, %305 : vector<8x128xf32>
    %307 = arith.mulf %306, %27 : vector<8x128xf32>
    %308 = arith.negf %307 : vector<8x128xf32>
    %309 = math.exp %308 : vector<8x128xf32>
    %cst_36 = arith.constant 1.000000e+00 : f32
    %310 = vector.broadcast %cst_36 : f32 to vector<8x128xf32>
    %311 = arith.addf %310, %309 : vector<8x128xf32>
    %312 = arith.divf %310, %311 : vector<8x128xf32>
    %313 = arith.mulf %312, %27 : vector<8x128xf32>
    %314 = arith.subf %313, %30 : vector<8x128xf32>
    %315 = vector.extract_strided_slice %314 {offsets = [0, 0], sizes = [8, 32], strides = [1, 1]} : vector<8x128xf32> to vector<8x32xf32>
    %316 = vector.extract_strided_slice %314 {offsets = [0, 32], sizes = [8, 32], strides = [1, 1]} : vector<8x128xf32> to vector<8x32xf32>
    %317 = vector.extract_strided_slice %314 {offsets = [0, 64], sizes = [8, 32], strides = [1, 1]} : vector<8x128xf32> to vector<8x32xf32>
    %318 = vector.extract_strided_slice %314 {offsets = [0, 96], sizes = [8, 32], strides = [1, 1]} : vector<8x128xf32> to vector<8x32xf32>
    %319 = arith.mulf %316, %279 : vector<8x32xf32>
    %320 = arith.mulf %315, %317 : vector<8x32xf32>
    %321 = arith.addf %319, %320 : vector<8x32xf32>
    %322 = math.tanh %321 : vector<8x32xf32>
    %323 = arith.mulf %318, %322 : vector<8x32xf32>
    %324 = vector.extract_strided_slice %18 {offsets = [56, 0], sizes = [8, 128], strides = [1, 1]} : vector<64x128xf32> to vector<8x128xf32>
    %325 = vector.extract_strided_slice %303 {offsets = [0, 0], sizes = [8, 128], strides = [1, 1]} : vector<8x256xf32> to vector<8x128xf32>
    %326 = arith.addf %324, %325 : vector<8x128xf32>
    %327 = arith.mulf %326, %27 : vector<8x128xf32>
    %328 = arith.negf %327 : vector<8x128xf32>
    %329 = math.exp %328 : vector<8x128xf32>
    %cst_37 = arith.constant 1.000000e+00 : f32
    %330 = vector.broadcast %cst_37 : f32 to vector<8x128xf32>
    %331 = arith.addf %330, %329 : vector<8x128xf32>
    %332 = arith.divf %330, %331 : vector<8x128xf32>
    %333 = arith.mulf %332, %27 : vector<8x128xf32>
    %334 = arith.subf %333, %30 : vector<8x128xf32>
    %335 = vector.extract_strided_slice %334 {offsets = [0, 0], sizes = [8, 32], strides = [1, 1]} : vector<8x128xf32> to vector<8x32xf32>
    %336 = vector.extract_strided_slice %334 {offsets = [0, 32], sizes = [8, 32], strides = [1, 1]} : vector<8x128xf32> to vector<8x32xf32>
    %337 = vector.extract_strided_slice %334 {offsets = [0, 64], sizes = [8, 32], strides = [1, 1]} : vector<8x128xf32> to vector<8x32xf32>
    %338 = vector.extract_strided_slice %334 {offsets = [0, 96], sizes = [8, 32], strides = [1, 1]} : vector<8x128xf32> to vector<8x32xf32>
    %339 = arith.mulf %336, %299 : vector<8x32xf32>
    %340 = arith.mulf %335, %337 : vector<8x32xf32>
    %341 = arith.addf %339, %340 : vector<8x32xf32>
    %342 = math.tanh %341 : vector<8x32xf32>
    %343 = arith.mulf %338, %342 : vector<8x32xf32>
    %344 = tpu.concatenate %343, %323 in 1 : vector<8x32xf32>, vector<8x32xf32> -> vector<8x64xf32>
    %cst_38 = arith.constant dense<0.000000e+00> : vector<8x256xf32>
    %345 = tpu.matmul %344, %0, %cst_38 {dimension_numbers = #tpu.dot_dimension_numbers<[1], [0], [0], [1], [0, 0, 1, 1], [], []>} : vector<8x64xf32>, vector<64x256xf32>, vector<8x256xf32> -> vector<8x256xf32>
    %346 = vector.extract_strided_slice %345 {offsets = [0, 128], sizes = [8, 128], strides = [1, 1]} : vector<8x256xf32> to vector<8x128xf32>
    %347 = vector.broadcast %3 : vector<1x128xf32> to vector<8x128xf32>
    %348 = arith.addf %346, %347 : vector<8x128xf32>
    %349 = arith.mulf %348, %27 : vector<8x128xf32>
    %350 = arith.negf %349 : vector<8x128xf32>
    %351 = math.exp %350 : vector<8x128xf32>
    %cst_39 = arith.constant 1.000000e+00 : f32
    %352 = vector.broadcast %cst_39 : f32 to vector<8x128xf32>
    %353 = arith.addf %352, %351 : vector<8x128xf32>
    %354 = arith.divf %352, %353 : vector<8x128xf32>
    %355 = arith.mulf %354, %27 : vector<8x128xf32>
    %356 = arith.subf %355, %30 : vector<8x128xf32>
    %357 = vector.extract_strided_slice %356 {offsets = [0, 0], sizes = [8, 32], strides = [1, 1]} : vector<8x128xf32> to vector<8x32xf32>
    %358 = vector.extract_strided_slice %356 {offsets = [0, 32], sizes = [8, 32], strides = [1, 1]} : vector<8x128xf32> to vector<8x32xf32>
    %359 = vector.extract_strided_slice %356 {offsets = [0, 64], sizes = [8, 32], strides = [1, 1]} : vector<8x128xf32> to vector<8x32xf32>
    %360 = vector.extract_strided_slice %356 {offsets = [0, 96], sizes = [8, 32], strides = [1, 1]} : vector<8x128xf32> to vector<8x32xf32>
    %361 = arith.mulf %358, %321 : vector<8x32xf32>
    %362 = arith.mulf %357, %359 : vector<8x32xf32>
    %363 = arith.addf %361, %362 : vector<8x32xf32>
    %364 = math.tanh %363 : vector<8x32xf32>
    %365 = arith.mulf %360, %364 : vector<8x32xf32>
    %366 = tpu.concatenate %343, %365 in 1 : vector<8x32xf32>, vector<8x32xf32> -> vector<8x64xf32>
    %367 = vector.broadcast %6 : vector<1x64xf32> to vector<8x64xf32>
    %368 = arith.mulf %366, %367 : vector<8x64xf32>
    %cst_40 = arith.constant dense<0.000000e+00> : vector<8xf32>
    %369 = vector.multi_reduction <add>, %368, %cst_40 [1] : vector<8x64xf32> to vector<8xf32>
    %370 = vector.shape_cast %369 : vector<8xf32> to vector<8x1xf32>
    %371 = vector.broadcast %7 : vector<1x1xf32> to vector<8x1xf32>
    %372 = arith.addf %370, %371 : vector<8x1xf32>
    %c0_41 = arith.constant 0 : index
    %c0_42 = arith.constant 0 : index
    %373 = vector.load %arg2[%c0_41, %c0_42] : memref<8x1xf32, #tpu.memory_space<vmem>>, vector<8x1xf32>
    tpu.vector_store %arg2[%c0_41, %c0_42], %372 {strides = array<i32>} : memref<8x1xf32, #tpu.memory_space<vmem>>, vector<8x1xf32>,
    return
  }
}

</mosaic_0001>

<llo_original>
// kernel: tpu_custom_call.1
$region0: #{tpu_custom_call.1}
  #allocation0 [shape = 'u32[]', space=smem, size = 0x4, offset = 0x4, fixed_abs, tag = 'smem constant byte address 0x4 - core index']
  #allocation1 [shape = 'u32[144,128]{1,0:T(1,128)}', space=vmem, size = 0x12000, scoped, tag = 'internal scratch']
  %s0 = inlined_call_operand.vmem [shape: f32[64,1], index: 0, kind: input, shape index: {}]
  %s1 = inlined_call_operand.hbm [shape: f32[104,256], index: 1, kind: input, shape index: {}]
  %s2 = inlined_call_operand.vmem [shape: f32[8,1], index: 2, kind: output, shape index: {}]
  %s3 = sld [smem:[#allocation0]]
  $region22: #{tpu_custom_call.1} parent=0
    _
  %s5 = ssub.s32 1, %s3
  %s6 = scalar_select 0, %s5, %s3
  $region1: #{tpu_custom_call.1} parent=0
    #allocation2 [shape = 'u8[106496]{0}', space=vmem, size = 0x1a000, scoped, tag = 'input window, operand 1, single buffered']
    #allocation3 [shape = 's32[1]{0}', space=sflag, size = 0x4, scoped, tag = 'scoped memory for tpu_custom_call.1']
    %7 = vsyncpa [#allocation3], 0
    // Predicated region
    $region2: #{tpu_custom_call.1} parent=1 // pred_check
      _
    $region3: #{tpu_custom_call.1} parent=1 // pred_check_branch
      %9 = sbr.rel (0) target = $region5
    $region4: #{tpu_custom_call.1} parent=1 // pred_region
      _
    $region5: #{tpu_custom_call.1} parent=1 // pred_fallthru
      _
    // Predicated region
    $region6: #{tpu_custom_call.1} parent=1 // pred_check
      _
    $region7: #{tpu_custom_call.1} parent=1 // pred_check_branch
      %11 = sbr.rel (0) target = $region9
    $region8: #{tpu_custom_call.1} parent=1 // pred_region
      %s13 = ssub.s32 3328, 3328
      %14 = vsyncadd [#allocation3], %s13
      %s15 = sshll.u32 [#allocation2], 4
      %s16 = int_to_ptr.vmem [resolvable:$true] %s15
      %21 = dma.hbm_to_vmem [thread:$0]  %s1, 3328, %s16, [#allocation3], 256, 256, 16
    $region9: #{tpu_custom_call.1} parent=1 // pred_fallthru
      _
    // Predicated region
    $region10: #{tpu_custom_call.1} parent=1 // pred_check
      _
    $region11: #{tpu_custom_call.1} parent=1 // pred_check_branch
      %23 = sbr.rel (0) target = $region13
    $region12: #{tpu_custom_call.1} parent=1 // pred_region
      %24 = dma.done [#allocation3], 3328
    $region13: #{tpu_custom_call.1} parent=1 // pred_fallthru
      _
    %v25 = vld [vmem:[#allocation2] sm:$0xff]
    %v26 = vld [vmem:[#allocation2 + $0x8] sm:$0xff]
    %v27 = vld [vmem:[#allocation2 + $0x10] sm:$0xff]
    %v28 = vld [vmem:[#allocation2 + $0x18] sm:$0xff]
    %v29 = vld [vmem:[#allocation2 + $0x20] sm:$0xff]
    %v30 = vld [vmem:[#allocation2 + $0x28] sm:$0xff]
    %v31 = vld [vmem:[#allocation2 + $0x30] sm:$0xff]
    %v32 = vld [vmem:[#allocation2 + $0x38] sm:$0xff]
    %v33 = vld [vmem:[#allocation2 + $0x40] sm:$0xff]
    %v34 = vld [vmem:[#allocation2 + $0x48] sm:$0xff]
    %v35 = vld [vmem:[#allocation2 + $0x50] sm:$0xff]
    %v36 = vld [vmem:[#allocation2 + $0x58] sm:$0xff]
    %v37 = vld [vmem:[#allocation2 + $0x60] sm:$0xff]
    %v38 = vld [vmem:[#allocation2 + $0x68] sm:$0xff]
    %v39 = vld [vmem:[#allocation2 + $0x70] sm:$0xff]
    %v40 = vld [vmem:[#allocation2 + $0x78] sm:$0xff]
    %v41 = vld [vmem:[#allocation2 + $0x80] sm:$0xff]
    %v42 = vld [vmem:[#allocation2 + $0x90] sm:$0xff]
    %v43 = vld [vmem:[#allocation2 + $0xa0] sm:$0xff]
    %v44 = vld [vmem:[#allocation2 + $0xb0] sm:$0xff]
    %v45 = vld [vmem:[#allocation2 + $0xc0] ss:$0 sm:$0xff]
    %v46 = vld [vmem:[#allocation2 + $0xc1] ss:$0 sm:$0xff]
    %v47 = vld [vmem:[#allocation2 + $0xc2] ss:$0 sm:$0xff]
    %v48 = vld [vmem:[#allocation2 + $0xc3] ss:$0 sm:$0xff]
    %v49 = vld [vmem:[#allocation2 + $0xc4] ss:$0 sm:$0xff]
    %v50 = vld [vmem:[#allocation2 + $0xc5] ss:$0 sm:$0xff]
    %v51 = vld [vmem:[%s0] sm:$0xff]
    %v52 = vld [vmem:[%s0 + $0x8] sm:$0xff]
    %v53 = vld [vmem:[%s0 + $0x10] sm:$0xff]
    %v54 = vld [vmem:[%s0 + $0x18] sm:$0xff]
    %v55 = vld [vmem:[%s0 + $0x20] sm:$0xff]
    %v56 = vld [vmem:[%s0 + $0x28] sm:$0xff]
    %v57 = vld [vmem:[%s0 + $0x30] sm:$0xff]
    %v58 = vld [vmem:[%s0 + $0x38] sm:$0xff]
    %60 = vset.pattern.permute.xlu0 0
    %61 = vperm.xlu0 %60, %v51
    %v62 = vpop.permute.xlu0 %61
    %65 = vset.pattern.permute.xlu0 0
    %66 = vperm.xlu0 %65, %v52
    %v67 = vpop.permute.xlu0 %66
    %70 = vset.pattern.permute.xlu0 0
    %71 = vperm.xlu0 %70, %v53
    %v72 = vpop.permute.xlu0 %71
    %75 = vset.pattern.permute.xlu0 0
    %76 = vperm.xlu0 %75, %v54
    %v77 = vpop.permute.xlu0 %76
    %80 = vset.pattern.permute.xlu0 0
    %81 = vperm.xlu0 %80, %v55
    %v82 = vpop.permute.xlu0 %81
    %85 = vset.pattern.permute.xlu0 0
    %86 = vperm.xlu0 %85, %v56
    %v87 = vpop.permute.xlu0 %86
    %90 = vset.pattern.permute.xlu0 0
    %91 = vperm.xlu0 %90, %v57
    %v92 = vpop.permute.xlu0 %91
    %95 = vset.pattern.permute.xlu0 0
    %96 = vperm.xlu0 %95, %v58
    %v97 = vpop.permute.xlu0 %96
    %v99 = vmul.f32 %v62, %v47
    %v100 = vmul.f32 %v67, %v47
    %v101 = vmul.f32 %v72, %v47
    %v102 = vmul.f32 %v77, %v47
    %v103 = vmul.f32 %v82, %v47
    %v104 = vmul.f32 %v87, %v47
    %v105 = vmul.f32 %v92, %v47
    %v106 = vmul.f32 %v97, %v47
    %v107 = vadd.f32 %v99, %v48
    %v108 = vadd.f32 %v100, %v48
    %v109 = vadd.f32 %v101, %v48
    %v110 = vadd.f32 %v102, %v48
    %v111 = vadd.f32 %v103, %v48
    %v112 = vadd.f32 %v104, %v48
    %v113 = vadd.f32 %v105, %v48
    %v114 = vadd.f32 %v106, %v48
    %v115 = vmax.f32 %v107, 0.0
    %v116 = vmax.f32 %v108, 0.0
    %v117 = vmax.f32 %v109, 0.0
    %v118 = vmax.f32 %v110, 0.0
    %v119 = vmax.f32 %v111, 0.0
    %v120 = vmax.f32 %v112, 0.0
    %v121 = vmax.f32 %v113, 0.0
    %v122 = vmax.f32 %v114, 0.0
    %vm123 = vcmask 261120
    %v125 = vsel %vm123, %v115, 0
    %v128 = vsel %vm123, %v116, 0
    %v131 = vsel %vm123, %v117, 0
    %v134 = vsel %vm123, %v118, 0
    %v137 = vsel %vm123, %v119, 0
    %v140 = vsel %vm123, %v120, 0
    %v143 = vsel %vm123, %v121, 0
    %v146 = vsel %vm123, %v122, 0
    %148 = vmatprep.subr.mxu0 0.0
    %149 = vmatpush1.msra.mxu0 %v41
    %150 = vmatprep.subr.mxu0 0.0
    %151 = vmatpush1.msra.mxu0 %v42
    %152 = vmatprep.subr.mxu0 0.0
    %153 = vmatpush1.msra.mxu0 %v43
    %154 = vmatprep.subr.mxu0 0.0
    %155 = vmatpush1.msra.mxu0 %v44
    %156 = vmatprep.subr.mxu0 0.0
    %157 = vmatpush1.msra.mxu0 0.0
    %158 = vmatprep.subr.mxu0 0.0
    %159 = vmatpush1.msra.mxu0 0.0
    %160 = vmatprep.subr.mxu0 0.0
    %161 = vmatpush1.msra.mxu0 0.0
    %162 = vmatprep.subr.mxu0 0.0
    %163 = vmatpush1.msra.mxu0 0.0
    %164 = vmatprep.subr.mxu0 0.0
    %165 = vmatpush1.msra.mxu0 0.0
    %166 = vmatprep.subr.mxu0 0.0
    %167 = vmatpush1.msra.mxu0 0.0
    %168 = vmatprep.subr.mxu0 0.0
    %169 = vmatpush1.msra.mxu0 0.0
    %170 = vmatprep.subr.mxu0 0.0
    %171 = vmatpush1.msra.mxu0 0.0
    %172 = vmatprep.subr.mxu0 0.0
    %173 = vmatpush1.msra.mxu0 0.0
    %174 = vmatprep.subr.mxu0 0.0
    %175 = vmatpush1.msra.mxu0 0.0
    %176 = vmatprep.subr.mxu0 0.0
    %177 = vmatpush1.msra.mxu0 0.0
    %178 = vmatprep.subr.mxu0 0.0
    %179 = vmatpush1.msra.mxu0 0.0
    %180 = vmatprep.subr.mxu0 0.0
    %181 = vmatpush1.msra.mxu0 0.0
    %182 = vmatprep.subr.mxu0 0.0
    %183 = vmatpush1.msra.mxu0 0.0
    %184 = vmatprep.subr.mxu0 0.0
    %185 = vmatpush1.msra.mxu0 0.0
    %186 = vmatprep.subr.mxu0 0.0
    %187 = vmatpush1.msra.mxu0 0.0
    %188 = vmatprep.subr.mxu0 0.0
    %189 = vmatpush1.msra.mxu0 0.0
    %190 = vmatprep.subr.mxu0 0.0
    %191 = vmatpush1.msra.mxu0 0.0
    %192 = vmatprep.subr.mxu0 0.0
    %193 = vmatpush1.msra.mxu0 0.0
    %194 = vmatprep.subr.mxu0 0.0
    %195 = vmatpush1.msra.mxu0 0.0
    %196 = vmatprep.subr.mxu0 0.0
    %197 = vmatpush1.msra.mxu0 0.0
    %198 = vmatprep.subr.mxu0 0.0
    %199 = vmatpush1.msra.mxu0 0.0
    %200 = vmatprep.subr.mxu0 0.0
    %201 = vmatpush1.msra.mxu0 0.0
    %202 = vmatprep.subr.mxu0 0.0
    %203 = vmatpush1.msra.mxu0 0.0
    %204 = vmatprep.subr.mxu0 0.0
    %205 = vmatpush1.msra.mxu0 0.0
    %206 = vmatprep.subr.mxu0 0.0
    %207 = vmatpush1.msra.mxu0 0.0
    %208 = vmatprep.subr.mxu0 0.0
    %209 = vmatpush1.msra.mxu0 0.0
    %210 = vmatprep.subr.mxu0 0.0
    %211 = vmatpush1.msra.mxu0 0.0
    %212 = vmatprep.mubr.f32.mxu0 0.0
    %213 = vmatmul.mubr.f32.gmra.mrb[0].mxu0 %v125
    %v214 = vpop.f32.mrb[0].mxu0
    %v215 = vadd.f32 %v45, %v214
    %v216 = vpop.f32.mrb[0].mxu0
    %217 = vmatprep.mubr.f32.mxu0 0.0
    %218 = vmatmul.mubr.f32.gmra.mrb[0].mxu0 %v128
    %v219 = vpop.f32.mrb[0].mxu0
    %v220 = vadd.f32 %v45, %v219
    %v221 = vpop.f32.mrb[0].mxu0
    %222 = vmatprep.mubr.f32.mxu0 0.0
    %223 = vmatmul.mubr.f32.gmra.mrb[0].mxu0 %v131
    %v224 = vpop.f32.mrb[0].mxu0
    %v225 = vadd.f32 %v45, %v224
    %v226 = vpop.f32.mrb[0].mxu0
    %227 = vmatprep.mubr.f32.mxu0 0.0
    %228 = vmatmul.mubr.f32.gmra.mrb[0].mxu0 %v134
    %v229 = vpop.f32.mrb[0].mxu0
    %v230 = vadd.f32 %v45, %v229
    %v231 = vpop.f32.mrb[0].mxu0
    %232 = vmatprep.mubr.f32.mxu0 0.0
    %233 = vmatmul.mubr.f32.gmra.mrb[0].mxu0 %v137
    %v234 = vpop.f32.mrb[0].mxu0
    %v235 = vadd.f32 %v45, %v234
    %v236 = vpop.f32.mrb[0].mxu0
    %237 = vmatprep.mubr.f32.mxu0 0.0
    %238 = vmatmul.mubr.f32.gmra.mrb[0].mxu0 %v140
    %v239 = vpop.f32.mrb[0].mxu0
    %v240 = vadd.f32 %v45, %v239
    %v241 = vpop.f32.mrb[0].mxu0
    %242 = vmatprep.mubr.f32.mxu0 0.0
    %243 = vmatmul.mubr.f32.gmra.mrb[0].mxu0 %v143
    %v244 = vpop.f32.mrb[0].mxu0
    %v245 = vadd.f32 %v45, %v244
    %v246 = vpop.f32.mrb[0].mxu0
    %247 = vmatprep.mubr.f32.mxu0 0.0
    %248 = vmatmul.mubr.f32.gmra.mrb[0].mxu0 %v146
    %v249 = vpop.f32.mrb[0].mxu0
    %v250 = vadd.f32 %v45, %v249
    %v251 = vpop.f32.mrb[0].mxu0
    %252 = vdwg.mxu0
    %v253 = vlaneseq
    %v254 = vand.u32 %v253, 127
    %vm255 = vcmp.ge.s32.totalorder %v254, 64
    %vm256 = vcmp.lt.s32.totalorder %v254, 96
    %vm257 = vmand %vm255, %vm256
    %v258 = vsel %vm257, 2.0, 1.0
    %v259 = vsel %vm257, 1.0, 0.0
    %v260 = vmul.f32 %v215, %v258
    %v261 = vxor.u32 %v260, 2147483648
    %v262 = vmul.f32 %v261, 1.442695
    %v263 = vpow.pop %v262
    %v264 = vadd.f32 %v263, 1.0
    %v265 = vrcp.pop %v264
    %v266 = vmul.f32 1.0, %v265
    %v267 = vmul.f32 %v266, %v258
    %v268 = vsub.f32 %v267, %v259
    %v269 = vmul.f32 %v268, 0.0
    %271 = vrot.lane.b32.xlu0 %v268, 64
    %v272 = vpop.permute.xlu0 %271
    %v274 = vmul.f32 %v268, %v272
    %276 = vrot.lane.b32.xlu0 %v274, 32
    %v277 = vpop.permute.xlu0 %276
    %v279 = vadd.f32 %v269, %v277
    %v280 = vtanh.pop %v279
    %282 = vrot.lane.b32.xlu0 %v280, 64
    %v283 = vpop.permute.xlu0 %282
    %v285 = vmul.f32 %v268, %v283
    %287 = vrot.lane.b32.xlu0 %v285, 32
    %v288 = vpop.permute.xlu0 %287
    %v290 = vsel %vm123, %v288, 0.0
    %vm291 = vcmask 523264
    %v293 = vsel %vm291, %v290, 0
    %295 = vmatprep.subr.mxu0 %v26
    %296 = vmatpush1.msra.mxu0 %v25
    %297 = vmatprep.subr.mxu0 %v28
    %298 = vmatpush1.msra.mxu0 %v27
    %299 = vmatprep.subr.mxu0 %v30
    %300 = vmatpush1.msra.mxu0 %v29
    %301 = vmatprep.subr.mxu0 %v32
    %302 = vmatpush1.msra.mxu0 %v31
    %303 = vmatprep.subr.mxu0 %v34
    %304 = vmatpush1.msra.mxu0 %v33
    %305 = vmatprep.subr.mxu0 %v36
    %306 = vmatpush1.msra.mxu0 %v35
    %307 = vmatprep.subr.mxu0 %v38
    %308 = vmatpush1.msra.mxu0 %v37
    %309 = vmatprep.subr.mxu0 %v40
    %310 = vmatpush1.msra.mxu0 %v39
    %311 = vmatprep.subr.mxu0 0.0
    %312 = vmatpush1.msra.mxu0 0.0
    %313 = vmatprep.subr.mxu0 0.0
    %314 = vmatpush1.msra.mxu0 0.0
    %315 = vmatprep.subr.mxu0 0.0
    %316 = vmatpush1.msra.mxu0 0.0
    %317 = vmatprep.subr.mxu0 0.0
    %318 = vmatpush1.msra.mxu0 0.0
    %319 = vmatprep.subr.mxu0 0.0
    %320 = vmatpush1.msra.mxu0 0.0
    %321 = vmatprep.subr.mxu0 0.0
    %322 = vmatpush1.msra.mxu0 0.0
    %323 = vmatprep.subr.mxu0 0.0
    %324 = vmatpush1.msra.mxu0 0.0
    %325 = vmatprep.subr.mxu0 0.0
    %326 = vmatpush1.msra.mxu0 0.0
    %327 = vmatprep.subr.mxu0 0.0
    %328 = vmatpush1.msra.mxu0 0.0
    %329 = vmatprep.subr.mxu0 0.0
    %330 = vmatpush1.msra.mxu0 0.0
    %331 = vmatprep.subr.mxu0 0.0
    %332 = vmatpush1.msra.mxu0 0.0
    %333 = vmatprep.subr.mxu0 0.0
    %334 = vmatpush1.msra.mxu0 0.0
    %335 = vmatprep.subr.mxu0 0.0
    %336 = vmatpush1.msra.mxu0 0.0
    %337 = vmatprep.subr.mxu0 0.0
    %338 = vmatpush1.msra.mxu0 0.0
    %339 = vmatprep.subr.mxu0 0.0
    %340 = vmatpush1.msra.mxu0 0.0
    %341 = vmatprep.subr.mxu0 0.0
    %342 = vmatpush1.msra.mxu0 0.0
    %343 = vmatprep.subr.mxu0 0.0
    %344 = vmatpush1.msra.mxu0 0.0
    %345 = vmatprep.subr.mxu0 0.0
    %346 = vmatpush1.msra.mxu0 0.0
    %347 = vmatprep.subr.mxu0 0.0
    %348 = vmatpush1.msra.mxu0 0.0
    %349 = vmatprep.subr.mxu0 0.0
    %350 = vmatpush1.msra.mxu0 0.0
    %351 = vmatprep.subr.mxu0 0.0
    %352 = vmatpush1.msra.mxu0 0.0
    %353 = vmatprep.subr.mxu0 0.0
    %354 = vmatpush1.msra.mxu0 0.0
    %355 = vmatprep.subr.mxu0 0.0
    %356 = vmatpush1.msra.mxu0 0.0
    %357 = vmatprep.subr.mxu0 0.0
    %358 = vmatpush1.msra.mxu0 0.0
    %359 = vmatprep.mubr.f32.mxu0 0.0
    %360 = vmatmul.mubr.f32.gmra.mrb[0].mxu0 %v293
    %v361 = vpop.f32.mrb[0].mxu0
    %v362 = vadd.f32 0.0, %v361
    %v363 = vpop.f32.mrb[0].mxu0
    %v364 = vadd.f32 0.0, %v363
    %365 = vdwg.mxu0
    %v366 = vadd.f32 %v364, %v46
    %v367 = vmul.f32 %v366, %v258
    %v368 = vxor.u32 %v367, 2147483648
    %v369 = vmul.f32 %v368, 1.442695
    %v370 = vpow.pop %v369
    %v371 = vadd.f32 %v370, 1.0
    %v372 = vrcp.pop %v371
    %v373 = vmul.f32 1.0, %v372
    %v374 = vmul.f32 %v373, %v258
    %v375 = vsub.f32 %v374, %v259
    %v376 = vmul.f32 %v375, 0.0
    %378 = vrot.lane.b32.xlu0 %v375, 64
    %v379 = vpop.permute.xlu0 %378
    %v381 = vmul.f32 %v375, %v379
    %383 = vrot.lane.b32.xlu0 %v381, 32
    %v384 = vpop.permute.xlu0 %383
    %v386 = vadd.f32 %v376, %v384
    %v387 = vtanh.pop %v386
    %389 = vrot.lane.b32.xlu0 %v387, 64
    %v390 = vpop.permute.xlu0 %389
    %v392 = vmul.f32 %v375, %v390
    %v393 = vadd.f32 %v220, %v362
    %v394 = vmul.f32 %v393, %v258
    %v395 = vxor.u32 %v394, 2147483648
    %v396 = vmul.f32 %v395, 1.442695
    %v397 = vpow.pop %v396
    %v398 = vadd.f32 %v397, 1.0
    %v399 = vrcp.pop %v398
    %v400 = vmul.f32 1.0, %v399
    %v401 = vmul.f32 %v400, %v258
    %v402 = vsub.f32 %v401, %v259
    %v403 = vmul.f32 %v402, %v279
    %405 = vrot.lane.b32.xlu0 %v402, 64
    %v406 = vpop.permute.xlu0 %405
    %v408 = vmul.f32 %v402, %v406
    %410 = vrot.lane.b32.xlu0 %v408, 32
    %v411 = vpop.permute.xlu0 %410
    %v413 = vadd.f32 %v403, %v411
    %v414 = vtanh.pop %v413
    %416 = vrot.lane.b32.xlu0 %v414, 64
    %v417 = vpop.permute.xlu0 %416
    %v419 = vmul.f32 %v402, %v417
    %421 = vrot.lane.b32.xlu0 %v419, 32
    %v422 = vpop.permute.xlu0 %421
    %425 = vrot.lane.b32.xlu0 %v392, 64
    %v426 = vpop.permute.xlu0 %425
    %v428 = vsel %vm123, %v422, %v426
    %v430 = vsel %vm291, %v428, 0
    %432 = vmatprep.subr.mxu0 %v26
    %433 = vmatpush1.msra.mxu0 %v25
    %434 = vmatprep.subr.mxu0 %v28
    %435 = vmatpush1.msra.mxu0 %v27
    %436 = vmatprep.subr.mxu0 %v30
    %437 = vmatpush1.msra.mxu0 %v29
    %438 = vmatprep.subr.mxu0 %v32
    %439 = vmatpush1.msra.mxu0 %v31
    %440 = vmatprep.subr.mxu0 %v34
    %441 = vmatpush1.msra.mxu0 %v33
    %442 = vmatprep.subr.mxu0 %v36
    %443 = vmatpush1.msra.mxu0 %v35
    %444 = vmatprep.subr.mxu0 %v38
    %445 = vmatpush1.msra.mxu0 %v37
    %446 = vmatprep.subr.mxu0 %v40
    %447 = vmatpush1.msra.mxu0 %v39
    %448 = vmatprep.subr.mxu0 0.0
    %449 = vmatpush1.msra.mxu0 0.0
    %450 = vmatprep.subr.mxu0 0.0
    %451 = vmatpush1.msra.mxu0 0.0
    %452 = vmatprep.subr.mxu0 0.0
    %453 = vmatpush1.msra.mxu0 0.0
    %454 = vmatprep.subr.mxu0 0.0
    %455 = vmatpush1.msra.mxu0 0.0
    %456 = vmatprep.subr.mxu0 0.0
    %457 = vmatpush1.msra.mxu0 0.0
    %458 = vmatprep.subr.mxu0 0.0
    %459 = vmatpush1.msra.mxu0 0.0
    %460 = vmatprep.subr.mxu0 0.0
    %461 = vmatpush1.msra.mxu0 0.0
    %462 = vmatprep.subr.mxu0 0.0
    %463 = vmatpush1.msra.mxu0 0.0
    %464 = vmatprep.subr.mxu0 0.0
    %465 = vmatpush1.msra.mxu0 0.0
    %466 = vmatprep.subr.mxu0 0.0
    %467 = vmatpush1.msra.mxu0 0.0
    %468 = vmatprep.subr.mxu0 0.0
    %469 = vmatpush1.msra.mxu0 0.0
    %470 = vmatprep.subr.mxu0 0.0
    %471 = vmatpush1.msra.mxu0 0.0
    %472 = vmatprep.subr.mxu0 0.0
    %473 = vmatpush1.msra.mxu0 0.0
    %474 = vmatprep.subr.mxu0 0.0
    %475 = vmatpush1.msra.mxu0 0.0
    %476 = vmatprep.subr.mxu0 0.0
    %477 = vmatpush1.msra.mxu0 0.0
    %478 = vmatprep.subr.mxu0 0.0
    %479 = vmatpush1.msra.mxu0 0.0
    %480 = vmatprep.subr.mxu0 0.0
    %481 = vmatpush1.msra.mxu0 0.0
    %482 = vmatprep.subr.mxu0 0.0
    %483 = vmatpush1.msra.mxu0 0.0
    %484 = vmatprep.subr.mxu0 0.0
    %485 = vmatpush1.msra.mxu0 0.0
    %486 = vmatprep.subr.mxu0 0.0
    %487 = vmatpush1.msra.mxu0 0.0
    %488 = vmatprep.subr.mxu0 0.0
    %489 = vmatpush1.msra.mxu0 0.0
    %490 = vmatprep.subr.mxu0 0.0
    %491 = vmatpush1.msra.mxu0 0.0
    %492 = vmatprep.subr.mxu0 0.0
    %493 = vmatpush1.msra.mxu0 0.0
    %494 = vmatprep.subr.mxu0 0.0
    %495 = vmatpush1.msra.mxu0 0.0
    %496 = vmatprep.mubr.f32.mxu0 0.0
    %497 = vmatmul.mubr.f32.gmra.mrb[0].mxu0 %v430
    %v498 = vpop.f32.mrb[0].mxu0
    %v499 = vadd.f32 0.0, %v498
    %v500 = vpop.f32.mrb[0].mxu0
    %v501 = vadd.f32 0.0, %v500
    %502 = vdwg.mxu0
    %v503 = vadd.f32 %v501, %v46
    %v504 = vmul.f32 %v503, %v258
    %v505 = vxor.u32 %v504, 2147483648
    %v506 = vmul.f32 %v505, 1.442695
    %v507 = vpow.pop %v506
    %v508 = vadd.f32 %v507, 1.0
    %v509 = vrcp.pop %v508
    %v510 = vmul.f32 1.0, %v509
    %v511 = vmul.f32 %v510, %v258
    %v512 = vsub.f32 %v511, %v259
    %v513 = vmul.f32 %v512, %v386
    %515 = vrot.lane.b32.xlu0 %v512, 64
    %v516 = vpop.permute.xlu0 %515
    %v518 = vmul.f32 %v512, %v516
    %520 = vrot.lane.b32.xlu0 %v518, 32
    %v521 = vpop.permute.xlu0 %520
    %v523 = vadd.f32 %v513, %v521
    %v524 = vtanh.pop %v523
    %526 = vrot.lane.b32.xlu0 %v524, 64
    %v527 = vpop.permute.xlu0 %526
    %v529 = vmul.f32 %v512, %v527
    %v530 = vadd.f32 %v225, %v499
    %v531 = vmul.f32 %v530, %v258
    %v532 = vxor.u32 %v531, 2147483648
    %v533 = vmul.f32 %v532, 1.442695
    %v534 = vpow.pop %v533
    %v535 = vadd.f32 %v534, 1.0
    %v536 = vrcp.pop %v535
    %v537 = vmul.f32 1.0, %v536
    %v538 = vmul.f32 %v537, %v258
    %v539 = vsub.f32 %v538, %v259
    %v540 = vmul.f32 %v539, %v413
    %542 = vrot.lane.b32.xlu0 %v539, 64
    %v543 = vpop.permute.xlu0 %542
    %v545 = vmul.f32 %v539, %v543
    %547 = vrot.lane.b32.xlu0 %v545, 32
    %v548 = vpop.permute.xlu0 %547
    %v550 = vadd.f32 %v540, %v548
    %v551 = vtanh.pop %v550
    %553 = vrot.lane.b32.xlu0 %v551, 64
    %v554 = vpop.permute.xlu0 %553
    %v556 = vmul.f32 %v539, %v554
    %558 = vrot.lane.b32.xlu0 %v556, 32
    %v559 = vpop.permute.xlu0 %558
    %562 = vrot.lane.b32.xlu0 %v529, 64
    %v563 = vpop.permute.xlu0 %562
    %v565 = vsel %vm123, %v559, %v563
    %v567 = vsel %vm291, %v565, 0
    %569 = vmatprep.subr.mxu0 %v26
    %570 = vmatpush1.msra.mxu0 %v25
    %571 = vmatprep.subr.mxu0 %v28
    %572 = vmatpush1.msra.mxu0 %v27
    %573 = vmatprep.subr.mxu0 %v30
    %574 = vmatpush1.msra.mxu0 %v29
    %575 = vmatprep.subr.mxu0 %v32
    %576 = vmatpush1.msra.mxu0 %v31
    %577 = vmatprep.subr.mxu0 %v34
    %578 = vmatpush1.msra.mxu0 %v33
    %579 = vmatprep.subr.mxu0 %v36
    %580 = vmatpush1.msra.mxu0 %v35
    %581 = vmatprep.subr.mxu0 %v38
    %582 = vmatpush1.msra.mxu0 %v37
    %583 = vmatprep.subr.mxu0 %v40
    %584 = vmatpush1.msra.mxu0 %v39
    %585 = vmatprep.subr.mxu0 0.0
    %586 = vmatpush1.msra.mxu0 0.0
    %587 = vmatprep.subr.mxu0 0.0
    %588 = vmatpush1.msra.mxu0 0.0
    %589 = vmatprep.subr.mxu0 0.0
    %590 = vmatpush1.msra.mxu0 0.0
    %591 = vmatprep.subr.mxu0 0.0
    %592 = vmatpush1.msra.mxu0 0.0
    %593 = vmatprep.subr.mxu0 0.0
    %594 = vmatpush1.msra.mxu0 0.0
    %595 = vmatprep.subr.mxu0 0.0
    %596 = vmatpush1.msra.mxu0 0.0
    %597 = vmatprep.subr.mxu0 0.0
    %598 = vmatpush1.msra.mxu0 0.0
    %599 = vmatprep.subr.mxu0 0.0
    %600 = vmatpush1.msra.mxu0 0.0
    %601 = vmatprep.subr.mxu0 0.0
    %602 = vmatpush1.msra.mxu0 0.0
    %603 = vmatprep.subr.mxu0 0.0
    %604 = vmatpush1.msra.mxu0 0.0
    %605 = vmatprep.subr.mxu0 0.0
    %606 = vmatpush1.msra.mxu0 0.0
    %607 = vmatprep.subr.mxu0 0.0
    %608 = vmatpush1.msra.mxu0 0.0
    %609 = vmatprep.subr.mxu0 0.0
    %610 = vmatpush1.msra.mxu0 0.0
    %611 = vmatprep.subr.mxu0 0.0
    %612 = vmatpush1.msra.mxu0 0.0
    %613 = vmatprep.subr.mxu0 0.0
    %614 = vmatpush1.msra.mxu0 0.0
    %615 = vmatprep.subr.mxu0 0.0
    %616 = vmatpush1.msra.mxu0 0.0
    %617 = vmatprep.subr.mxu0 0.0
    %618 = vmatpush1.msra.mxu0 0.0
    %619 = vmatprep.subr.mxu0 0.0
    %620 = vmatpush1.msra.mxu0 0.0
    %621 = vmatprep.subr.mxu0 0.0
    %622 = vmatpush1.msra.mxu0 0.0
    %623 = vmatprep.subr.mxu0 0.0
    %624 = vmatpush1.msra.mxu0 0.0
    %625 = vmatprep.subr.mxu0 0.0
    %626 = vmatpush1.msra.mxu0 0.0
    %627 = vmatprep.subr.mxu0 0.0
    %628 = vmatpush1.msra.mxu0 0.0
    %629 = vmatprep.subr.mxu0 0.0
    %630 = vmatpush1.msra.mxu0 0.0
    %631 = vmatprep.subr.mxu0 0.0
    %632 = vmatpush1.msra.mxu0 0.0
    %633 = vmatprep.mubr.f32.mxu0 0.0
    %634 = vmatmul.mubr.f32.gmra.mrb[0].mxu0 %v567
    %v635 = vpop.f32.mrb[0].mxu0
    %v636 = vadd.f32 0.0, %v635
    %v637 = vpop.f32.mrb[0].mxu0
    %v638 = vadd.f32 0.0, %v637
    %639 = vdwg.mxu0
    %v640 = vadd.f32 %v638, %v46
    %v641 = vmul.f32 %v640, %v258
    %v642 = vxor.u32 %v641, 2147483648
    %v643 = vmul.f32 %v642, 1.442695
    %v644 = vpow.pop %v643
    %v645 = vadd.f32 %v644, 1.0
    %v646 = vrcp.pop %v645
    %v647 = vmul.f32 1.0, %v646
    %v648 = vmul.f32 %v647, %v258
    %v649 = vsub.f32 %v648, %v259
    %v650 = vmul.f32 %v649, %v523
    %652 = vrot.lane.b32.xlu0 %v649, 64
    %v653 = vpop.permute.xlu0 %652
    %v655 = vmul.f32 %v649, %v653
    %657 = vrot.lane.b32.xlu0 %v655, 32
    %v658 = vpop.permute.xlu0 %657
    %v660 = vadd.f32 %v650, %v658
    %v661 = vtanh.pop %v660
    %663 = vrot.lane.b32.xlu0 %v661, 64
    %v664 = vpop.permute.xlu0 %663
    %v666 = vmul.f32 %v649, %v664
    %v667 = vadd.f32 %v230, %v636
    %v668 = vmul.f32 %v667, %v258
    %v669 = vxor.u32 %v668, 2147483648
    %v670 = vmul.f32 %v669, 1.442695
    %v671 = vpow.pop %v670
    %v672 = vadd.f32 %v671, 1.0
    %v673 = vrcp.pop %v672
    %v674 = vmul.f32 1.0, %v673
    %v675 = vmul.f32 %v674, %v258
    %v676 = vsub.f32 %v675, %v259
    %v677 = vmul.f32 %v676, %v550
    %679 = vrot.lane.b32.xlu0 %v676, 64
    %v680 = vpop.permute.xlu0 %679
    %v682 = vmul.f32 %v676, %v680
    %684 = vrot.lane.b32.xlu0 %v682, 32
    %v685 = vpop.permute.xlu0 %684
    %v687 = vadd.f32 %v677, %v685
    %v688 = vtanh.pop %v687
    %690 = vrot.lane.b32.xlu0 %v688, 64
    %v691 = vpop.permute.xlu0 %690
    %v693 = vmul.f32 %v676, %v691
    %695 = vrot.lane.b32.xlu0 %v693, 32
    %v696 = vpop.permute.xlu0 %695
    %699 = vrot.lane.b32.xlu0 %v666, 64
    %v700 = vpop.permute.xlu0 %699
    %v702 = vsel %vm123, %v696, %v700
    %v704 = vsel %vm291, %v702, 0
    %706 = vmatprep.subr.mxu0 %v26
    %707 = vmatpush1.msra.mxu0 %v25
    %708 = vmatprep.subr.mxu0 %v28
    %709 = vmatpush1.msra.mxu0 %v27
    %710 = vmatprep.subr.mxu0 %v30
    %711 = vmatpush1.msra.mxu0 %v29
    %712 = vmatprep.subr.mxu0 %v32
    %713 = vmatpush1.msra.mxu0 %v31
    %714 = vmatprep.subr.mxu0 %v34
    %715 = vmatpush1.msra.mxu0 %v33
    %716 = vmatprep.subr.mxu0 %v36
    %717 = vmatpush1.msra.mxu0 %v35
    %718 = vmatprep.subr.mxu0 %v38
    %719 = vmatpush1.msra.mxu0 %v37
    %720 = vmatprep.subr.mxu0 %v40
    %721 = vmatpush1.msra.mxu0 %v39
    %722 = vmatprep.subr.mxu0 0.0
    %723 = vmatpush1.msra.mxu0 0.0
    %724 = vmatprep.subr.mxu0 0.0
    %725 = vmatpush1.msra.mxu0 0.0
    %726 = vmatprep.subr.mxu0 0.0
    %727 = vmatpush1.msra.mxu0 0.0
    %728 = vmatprep.subr.mxu0 0.0
    %729 = vmatpush1.msra.mxu0 0.0
    %730 = vmatprep.subr.mxu0 0.0
    %731 = vmatpush1.msra.mxu0 0.0
    %732 = vmatprep.subr.mxu0 0.0
    %733 = vmatpush1.msra.mxu0 0.0
    %734 = vmatprep.subr.mxu0 0.0
    %735 = vmatpush1.msra.mxu0 0.0
    %736 = vmatprep.subr.mxu0 0.0
    %737 = vmatpush1.msra.mxu0 0.0
    %738 = vmatprep.subr.mxu0 0.0
    %739 = vmatpush1.msra.mxu0 0.0
    %740 = vmatprep.subr.mxu0 0.0
    %741 = vmatpush1.msra.mxu0 0.0
    %742 = vmatprep.subr.mxu0 0.0
    %743 = vmatpush1.msra.mxu0 0.0
    %744 = vmatprep.subr.mxu0 0.0
    %745 = vmatpush1.msra.mxu0 0.0
    %746 = vmatprep.subr.mxu0 0.0
    %747 = vmatpush1.msra.mxu0 0.0
    %748 = vmatprep.subr.mxu0 0.0
    %749 = vmatpush1.msra.mxu0 0.0
    %750 = vmatprep.subr.mxu0 0.0
    %751 = vmatpush1.msra.mxu0 0.0
    %752 = vmatprep.subr.mxu0 0.0
    %753 = vmatpush1.msra.mxu0 0.0
    %754 = vmatprep.subr.mxu0 0.0
    %755 = vmatpush1.msra.mxu0 0.0
    %756 = vmatprep.subr.mxu0 0.0
    %757 = vmatpush1.msra.mxu0 0.0
    %758 = vmatprep.subr.mxu0 0.0
    %759 = vmatpush1.msra.mxu0 0.0
    %760 = vmatprep.subr.mxu0 0.0
    %761 = vmatpush1.msra.mxu0 0.0
    %762 = vmatprep.subr.mxu0 0.0
    %763 = vmatpush1.msra.mxu0 0.0
    %764 = vmatprep.subr.mxu0 0.0
    %765 = vmatpush1.msra.mxu0 0.0
    %766 = vmatprep.subr.mxu0 0.0
    %767 = vmatpush1.msra.mxu0 0.0
    %768 = vmatprep.subr.mxu0 0.0
    %769 = vmatpush1.msra.mxu0 0.0
    %770 = vmatprep.mubr.f32.mxu0 0.0
    %771 = vmatmul.mubr.f32.gmra.mrb[0].mxu0 %v704
    %v772 = vpop.f32.mrb[0].mxu0
    %v773 = vadd.f32 0.0, %v772
    %v774 = vpop.f32.mrb[0].mxu0
    %v775 = vadd.f32 0.0, %v774
    %776 = vdwg.mxu0
    %v777 = vadd.f32 %v775, %v46
    %v778 = vmul.f32 %v777, %v258
    %v779 = vxor.u32 %v778, 2147483648
    %v780 = vmul.f32 %v779, 1.442695
    %v781 = vpow.pop %v780
    %v782 = vadd.f32 %v781, 1.0
    %v783 = vrcp.pop %v782
    %v784 = vmul.f32 1.0, %v783
    %v785 = vmul.f32 %v784, %v258
    %v786 = vsub.f32 %v785, %v259
    %v787 = vmul.f32 %v786, %v660
    %789 = vrot.lane.b32.xlu0 %v786, 64
    %v790 = vpop.permute.xlu0 %789
    %v792 = vmul.f32 %v786, %v790
    %794 = vrot.lane.b32.xlu0 %v792, 32
    %v795 = vpop.permute.xlu0 %794
    %v797 = vadd.f32 %v787, %v795
    %v798 = vtanh.pop %v797
    %800 = vrot.lane.b32.xlu0 %v798, 64
    %v801 = vpop.permute.xlu0 %800
    %v803 = vmul.f32 %v786, %v801
    %v804 = vadd.f32 %v235, %v773
    %v805 = vmul.f32 %v804, %v258
    %v806 = vxor.u32 %v805, 2147483648
    %v807 = vmul.f32 %v806, 1.442695
    %v808 = vpow.pop %v807
    %v809 = vadd.f32 %v808, 1.0
    %v810 = vrcp.pop %v809
    %v811 = vmul.f32 1.0, %v810
    %v812 = vmul.f32 %v811, %v258
    %v813 = vsub.f32 %v812, %v259
    %v814 = vmul.f32 %v813, %v687
    %816 = vrot.lane.b32.xlu0 %v813, 64
    %v817 = vpop.permute.xlu0 %816
    %v819 = vmul.f32 %v813, %v817
    %821 = vrot.lane.b32.xlu0 %v819, 32
    %v822 = vpop.permute.xlu0 %821
    %v824 = vadd.f32 %v814, %v822
    %v825 = vtanh.pop %v824
    %827 = vrot.lane.b32.xlu0 %v825, 64
    %v828 = vpop.permute.xlu0 %827
    %v830 = vmul.f32 %v813, %v828
    %832 = vrot.lane.b32.xlu0 %v830, 32
    %v833 = vpop.permute.xlu0 %832
    %836 = vrot.lane.b32.xlu0 %v803, 64
    %v837 = vpop.permute.xlu0 %836
    %v839 = vsel %vm123, %v833, %v837
    %v841 = vsel %vm291, %v839, 0
    %843 = vmatprep.subr.mxu0 %v26
    %844 = vmatpush1.msra.mxu0 %v25
    %845 = vmatprep.subr.mxu0 %v28
    %846 = vmatpush1.msra.mxu0 %v27
    %847 = vmatprep.subr.mxu0 %v30
    %848 = vmatpush1.msra.mxu0 %v29
    %849 = vmatprep.subr.mxu0 %v32
    %850 = vmatpush1.msra.mxu0 %v31
    %851 = vmatprep.subr.mxu0 %v34
    %852 = vmatpush1.msra.mxu0 %v33
    %853 = vmatprep.subr.mxu0 %v36
    %854 = vmatpush1.msra.mxu0 %v35
    %855 = vmatprep.subr.mxu0 %v38
    %856 = vmatpush1.msra.mxu0 %v37
    %857 = vmatprep.subr.mxu0 %v40
    %858 = vmatpush1.msra.mxu0 %v39
    %859 = vmatprep.subr.mxu0 0.0
    %860 = vmatpush1.msra.mxu0 0.0
    %861 = vmatprep.subr.mxu0 0.0
    %862 = vmatpush1.msra.mxu0 0.0
    %863 = vmatprep.subr.mxu0 0.0
    %864 = vmatpush1.msra.mxu0 0.0
    %865 = vmatprep.subr.mxu0 0.0
    %866 = vmatpush1.msra.mxu0 0.0
    %867 = vmatprep.subr.mxu0 0.0
    %868 = vmatpush1.msra.mxu0 0.0
    %869 = vmatprep.subr.mxu0 0.0
    %870 = vmatpush1.msra.mxu0 0.0
    %871 = vmatprep.subr.mxu0 0.0
    %872 = vmatpush1.msra.mxu0 0.0
    %873 = vmatprep.subr.mxu0 0.0
    %874 = vmatpush1.msra.mxu0 0.0
    %875 = vmatprep.subr.mxu0 0.0
    %876 = vmatpush1.msra.mxu0 0.0
    %877 = vmatprep.subr.mxu0 0.0
    %878 = vmatpush1.msra.mxu0 0.0
    %879 = vmatprep.subr.mxu0 0.0
    %880 = vmatpush1.msra.mxu0 0.0
    %881 = vmatprep.subr.mxu0 0.0
    %882 = vmatpush1.msra.mxu0 0.0
    %883 = vmatprep.subr.mxu0 0.0
    %884 = vmatpush1.msra.mxu0 0.0
    %885 = vmatprep.subr.mxu0 0.0
    %886 = vmatpush1.msra.mxu0 0.0
    %887 = vmatprep.subr.mxu0 0.0
    %888 = vmatpush1.msra.mxu0 0.0
    %889 = vmatprep.subr.mxu0 0.0
    %890 = vmatpush1.msra.mxu0 0.0
    %891 = vmatprep.subr.mxu0 0.0
    %892 = vmatpush1.msra.mxu0 0.0
    %893 = vmatprep.subr.mxu0 0.0
    %894 = vmatpush1.msra.mxu0 0.0
    %895 = vmatprep.subr.mxu0 0.0
    %896 = vmatpush1.msra.mxu0 0.0
    %897 = vmatprep.subr.mxu0 0.0
    %898 = vmatpush1.msra.mxu0 0.0
    %899 = vmatprep.subr.mxu0 0.0
    %900 = vmatpush1.msra.mxu0 0.0
    %901 = vmatprep.subr.mxu0 0.0
    %902 = vmatpush1.msra.mxu0 0.0
    %903 = vmatprep.subr.mxu0 0.0
    %904 = vmatpush1.msra.mxu0 0.0
    %905 = vmatprep.subr.mxu0 0.0
    %906 = vmatpush1.msra.mxu0 0.0
    %907 = vmatprep.mubr.f32.mxu0 0.0
    %908 = vmatmul.mubr.f32.gmra.mrb[0].mxu0 %v841
    %v909 = vpop.f32.mrb[0].mxu0
    %v910 = vadd.f32 0.0, %v909
    %v911 = vpop.f32.mrb[0].mxu0
    %v912 = vadd.f32 0.0, %v911
    %913 = vdwg.mxu0
    %v914 = vadd.f32 %v912, %v46
    %v915 = vmul.f32 %v914, %v258
    %v916 = vxor.u32 %v915, 2147483648
    %v917 = vmul.f32 %v916, 1.442695
    %v918 = vpow.pop %v917
    %v919 = vadd.f32 %v918, 1.0
    %v920 = vrcp.pop %v919
    %v921 = vmul.f32 1.0, %v920
    %v922 = vmul.f32 %v921, %v258
    %v923 = vsub.f32 %v922, %v259
    %v924 = vmul.f32 %v923, %v797
    %926 = vrot.lane.b32.xlu0 %v923, 64
    %v927 = vpop.permute.xlu0 %926
    %v929 = vmul.f32 %v923, %v927
    %931 = vrot.lane.b32.xlu0 %v929, 32
    %v932 = vpop.permute.xlu0 %931
    %v934 = vadd.f32 %v924, %v932
    %v935 = vtanh.pop %v934
    %937 = vrot.lane.b32.xlu0 %v935, 64
    %v938 = vpop.permute.xlu0 %937
    %v940 = vmul.f32 %v923, %v938
    %v941 = vadd.f32 %v240, %v910
    %v942 = vmul.f32 %v941, %v258
    %v943 = vxor.u32 %v942, 2147483648
    %v944 = vmul.f32 %v943, 1.442695
    %v945 = vpow.pop %v944
    %v946 = vadd.f32 %v945, 1.0
    %v947 = vrcp.pop %v946
    %v948 = vmul.f32 1.0, %v947
    %v949 = vmul.f32 %v948, %v258
    %v950 = vsub.f32 %v949, %v259
    %v951 = vmul.f32 %v950, %v824
    %953 = vrot.lane.b32.xlu0 %v950, 64
    %v954 = vpop.permute.xlu0 %953
    %v956 = vmul.f32 %v950, %v954
    %958 = vrot.lane.b32.xlu0 %v956, 32
    %v959 = vpop.permute.xlu0 %958
    %v961 = vadd.f32 %v951, %v959
    %v962 = vtanh.pop %v961
    %964 = vrot.lane.b32.xlu0 %v962, 64
    %v965 = vpop.permute.xlu0 %964
    %v967 = vmul.f32 %v950, %v965
    %969 = vrot.lane.b32.xlu0 %v967, 32
    %v970 = vpop.permute.xlu0 %969
    %973 = vrot.lane.b32.xlu0 %v940, 64
    %v974 = vpop.permute.xlu0 %973
    %v976 = vsel %vm123, %v970, %v974
    %v978 = vsel %vm291, %v976, 0
    %980 = vmatprep.subr.mxu0 %v26
    %981 = vmatpush1.msra.mxu0 %v25
    %982 = vmatprep.subr.mxu0 %v28
    %983 = vmatpush1.msra.mxu0 %v27
    %984 = vmatprep.subr.mxu0 %v30
    %985 = vmatpush1.msra.mxu0 %v29
    %986 = vmatprep.subr.mxu0 %v32
    %987 = vmatpush1.msra.mxu0 %v31
    %988 = vmatprep.subr.mxu0 %v34
    %989 = vmatpush1.msra.mxu0 %v33
    %990 = vmatprep.subr.mxu0 %v36
    %991 = vmatpush1.msra.mxu0 %v35
    %992 = vmatprep.subr.mxu0 %v38
    %993 = vmatpush1.msra.mxu0 %v37
    %994 = vmatprep.subr.mxu0 %v40
    %995 = vmatpush1.msra.mxu0 %v39
    %996 = vmatprep.subr.mxu0 0.0
    %997 = vmatpush1.msra.mxu0 0.0
    %998 = vmatprep.subr.mxu0 0.0
    %999 = vmatpush1.msra.mxu0 0.0
    %1000 = vmatprep.subr.mxu0 0.0
    %1001 = vmatpush1.msra.mxu0 0.0
    %1002 = vmatprep.subr.mxu0 0.0
    %1003 = vmatpush1.msra.mxu0 0.0
    %1004 = vmatprep.subr.mxu0 0.0
    %1005 = vmatpush1.msra.mxu0 0.0
    %1006 = vmatprep.subr.mxu0 0.0
    %1007 = vmatpush1.msra.mxu0 0.0
    %1008 = vmatprep.subr.mxu0 0.0
    %1009 = vmatpush1.msra.mxu0 0.0
    %1010 = vmatprep.subr.mxu0 0.0
    %1011 = vmatpush1.msra.mxu0 0.0
    %1012 = vmatprep.subr.mxu0 0.0
    %1013 = vmatpush1.msra.mxu0 0.0
    %1014 = vmatprep.subr.mxu0 0.0
    %1015 = vmatpush1.msra.mxu0 0.0
    %1016 = vmatprep.subr.mxu0 0.0
    %1017 = vmatpush1.msra.mxu0 0.0
    %1018 = vmatprep.subr.mxu0 0.0
    %1019 = vmatpush1.msra.mxu0 0.0
    %1020 = vmatprep.subr.mxu0 0.0
    %1021 = vmatpush1.msra.mxu0 0.0
    %1022 = vmatprep.subr.mxu0 0.0
    %1023 = vmatpush1.msra.mxu0 0.0
    %1024 = vmatprep.subr.mxu0 0.0
    %1025 = vmatpush1.msra.mxu0 0.0
    %1026 = vmatprep.subr.mxu0 0.0
    %1027 = vmatpush1.msra.mxu0 0.0
    %1028 = vmatprep.subr.mxu0 0.0
    %1029 = vmatpush1.msra.mxu0 0.0
    %1030 = vmatprep.subr.mxu0 0.0
    %1031 = vmatpush1.msra.mxu0 0.0
    %1032 = vmatprep.subr.mxu0 0.0
    %1033 = vmatpush1.msra.mxu0 0.0
    %1034 = vmatprep.subr.mxu0 0.0
    %1035 = vmatpush1.msra.mxu0 0.0
    %1036 = vmatprep.subr.mxu0 0.0
    %1037 = vmatpush1.msra.mxu0 0.0
    %1038 = vmatprep.subr.mxu0 0.0
    %1039 = vmatpush1.msra.mxu0 0.0
    %1040 = vmatprep.subr.mxu0 0.0
    %1041 = vmatpush1.msra.mxu0 0.0
    %1042 = vmatprep.subr.mxu0 0.0
    %1043 = vmatpush1.msra.mxu0 0.0
    %1044 = vmatprep.mubr.f32.mxu0 0.0
    %1045 = vmatmul.mubr.f32.gmra.mrb[0].mxu0 %v978
    %v1046 = vpop.f32.mrb[0].mxu0
    %v1047 = vadd.f32 0.0, %v1046
    %v1048 = vpop.f32.mrb[0].mxu0
    %v1049 = vadd.f32 0.0, %v1048
    %1050 = vdwg.mxu0
    %v1051 = vadd.f32 %v1049, %v46
    %v1052 = vmul.f32 %v1051, %v258
    %v1053 = vxor.u32 %v1052, 2147483648
    %v1054 = vmul.f32 %v1053, 1.442695
    %v1055 = vpow.pop %v1054
    %v1056 = vadd.f32 %v1055, 1.0
    %v1057 = vrcp.pop %v1056
    %v1058 = vmul.f32 1.0, %v1057
    %v1059 = vmul.f32 %v1058, %v258
    %v1060 = vsub.f32 %v1059, %v259
    %v1061 = vmul.f32 %v1060, %v934
    %1063 = vrot.lane.b32.xlu0 %v1060, 64
    %v1064 = vpop.permute.xlu0 %1063
    %v1066 = vmul.f32 %v1060, %v1064
    %1068 = vrot.lane.b32.xlu0 %v1066, 32
    %v1069 = vpop.permute.xlu0 %1068
    %v1071 = vadd.f32 %v1061, %v1069
    %v1072 = vtanh.pop %v1071
    %1074 = vrot.lane.b32.xlu0 %v1072, 64
    %v1075 = vpop.permute.xlu0 %1074
    %v1077 = vmul.f32 %v1060, %v1075
    %v1078 = vadd.f32 %v245, %v1047
    %v1079 = vmul.f32 %v1078, %v258
    %v1080 = vxor.u32 %v1079, 2147483648
    %v1081 = vmul.f32 %v1080, 1.442695
    %v1082 = vpow.pop %v1081
    %v1083 = vadd.f32 %v1082, 1.0
    %v1084 = vrcp.pop %v1083
    %v1085 = vmul.f32 1.0, %v1084
    %v1086 = vmul.f32 %v1085, %v258
    %v1087 = vsub.f32 %v1086, %v259
    %v1088 = vmul.f32 %v1087, %v961
    %1090 = vrot.lane.b32.xlu0 %v1087, 64
    %v1091 = vpop.permute.xlu0 %1090
    %v1093 = vmul.f32 %v1087, %v1091
    %1095 = vrot.lane.b32.xlu0 %v1093, 32
    %v1096 = vpop.permute.xlu0 %1095
    %v1098 = vadd.f32 %v1088, %v1096
    %v1099 = vtanh.pop %v1098
    %1101 = vrot.lane.b32.xlu0 %v1099, 64
    %v1102 = vpop.permute.xlu0 %1101
    %v1104 = vmul.f32 %v1087, %v1102
    %1106 = vrot.lane.b32.xlu0 %v1104, 32
    %v1107 = vpop.permute.xlu0 %1106
    %1110 = vrot.lane.b32.xlu0 %v1077, 64
    %v1111 = vpop.permute.xlu0 %1110
    %v1113 = vsel %vm123, %v1107, %v1111
    %v1115 = vsel %vm291, %v1113, 0
    %1117 = vmatprep.subr.mxu0 %v26
    %1118 = vmatpush1.msra.mxu0 %v25
    %1119 = vmatprep.subr.mxu0 %v28
    %1120 = vmatpush1.msra.mxu0 %v27
    %1121 = vmatprep.subr.mxu0 %v30
    %1122 = vmatpush1.msra.mxu0 %v29
    %1123 = vmatprep.subr.mxu0 %v32
    %1124 = vmatpush1.msra.mxu0 %v31
    %1125 = vmatprep.subr.mxu0 %v34
    %1126 = vmatpush1.msra.mxu0 %v33
    %1127 = vmatprep.subr.mxu0 %v36
    %1128 = vmatpush1.msra.mxu0 %v35
    %1129 = vmatprep.subr.mxu0 %v38
    %1130 = vmatpush1.msra.mxu0 %v37
    %1131 = vmatprep.subr.mxu0 %v40
    %1132 = vmatpush1.msra.mxu0 %v39
    %1133 = vmatprep.subr.mxu0 0.0
    %1134 = vmatpush1.msra.mxu0 0.0
    %1135 = vmatprep.subr.mxu0 0.0
    %1136 = vmatpush1.msra.mxu0 0.0
    %1137 = vmatprep.subr.mxu0 0.0
    %1138 = vmatpush1.msra.mxu0 0.0
    %1139 = vmatprep.subr.mxu0 0.0
    %1140 = vmatpush1.msra.mxu0 0.0
    %1141 = vmatprep.subr.mxu0 0.0
    %1142 = vmatpush1.msra.mxu0 0.0
    %1143 = vmatprep.subr.mxu0 0.0
    %1144 = vmatpush1.msra.mxu0 0.0
    %1145 = vmatprep.subr.mxu0 0.0
    %1146 = vmatpush1.msra.mxu0 0.0
    %1147 = vmatprep.subr.mxu0 0.0
    %1148 = vmatpush1.msra.mxu0 0.0
    %1149 = vmatprep.subr.mxu0 0.0
    %1150 = vmatpush1.msra.mxu0 0.0
    %1151 = vmatprep.subr.mxu0 0.0
    %1152 = vmatpush1.msra.mxu0 0.0
    %1153 = vmatprep.subr.mxu0 0.0
    %1154 = vmatpush1.msra.mxu0 0.0
    %1155 = vmatprep.subr.mxu0 0.0
    %1156 = vmatpush1.msra.mxu0 0.0
    %1157 = vmatprep.subr.mxu0 0.0
    %1158 = vmatpush1.msra.mxu0 0.0
    %1159 = vmatprep.subr.mxu0 0.0
    %1160 = vmatpush1.msra.mxu0 0.0
    %1161 = vmatprep.subr.mxu0 0.0
    %1162 = vmatpush1.msra.mxu0 0.0
    %1163 = vmatprep.subr.mxu0 0.0
    %1164 = vmatpush1.msra.mxu0 0.0
    %1165 = vmatprep.subr.mxu0 0.0
    %1166 = vmatpush1.msra.mxu0 0.0
    %1167 = vmatprep.subr.mxu0 0.0
    %1168 = vmatpush1.msra.mxu0 0.0
    %1169 = vmatprep.subr.mxu0 0.0
    %1170 = vmatpush1.msra.mxu0 0.0
    %1171 = vmatprep.subr.mxu0 0.0
    %1172 = vmatpush1.msra.mxu0 0.0
    %1173 = vmatprep.subr.mxu0 0.0
    %1174 = vmatpush1.msra.mxu0 0.0
    %1175 = vmatprep.subr.mxu0 0.0
    %1176 = vmatpush1.msra.mxu0 0.0
    %1177 = vmatprep.subr.mxu0 0.0
    %1178 = vmatpush1.msra.mxu0 0.0
    %1179 = vmatprep.subr.mxu0 0.0
    %1180 = vmatpush1.msra.mxu0 0.0
    %1181 = vmatprep.mubr.f32.mxu0 0.0
    %1182 = vmatmul.mubr.f32.gmra.mrb[0].mxu0 %v1115
    %v1183 = vpop.f32.mrb[0].mxu0
    %v1184 = vadd.f32 0.0, %v1183
    %v1185 = vpop.f32.mrb[0].mxu0
    %v1186 = vadd.f32 0.0, %v1185
    %1187 = vdwg.mxu0
    %v1188 = vadd.f32 %v1186, %v46
    %v1189 = vmul.f32 %v1188, %v258
    %v1190 = vxor.u32 %v1189, 2147483648
    %v1191 = vmul.f32 %v1190, 1.442695
    %v1192 = vpow.pop %v1191
    %v1193 = vadd.f32 %v1192, 1.0
    %v1194 = vrcp.pop %v1193
    %v1195 = vmul.f32 1.0, %v1194
    %v1196 = vmul.f32 %v1195, %v258
    %v1197 = vsub.f32 %v1196, %v259
    %v1198 = vmul.f32 %v1197, %v1071
    %1200 = vrot.lane.b32.xlu0 %v1197, 64
    %v1201 = vpop.permute.xlu0 %1200
    %v1203 = vmul.f32 %v1197, %v1201
    %1205 = vrot.lane.b32.xlu0 %v1203, 32
    %v1206 = vpop.permute.xlu0 %1205
    %v1208 = vadd.f32 %v1198, %v1206
    %v1209 = vtanh.pop %v1208
    %1211 = vrot.lane.b32.xlu0 %v1209, 64
    %v1212 = vpop.permute.xlu0 %1211
    %v1214 = vmul.f32 %v1197, %v1212
    %v1215 = vadd.f32 %v250, %v1184
    %v1216 = vmul.f32 %v1215, %v258
    %v1217 = vxor.u32 %v1216, 2147483648
    %v1218 = vmul.f32 %v1217, 1.442695
    %v1219 = vpow.pop %v1218
    %v1220 = vadd.f32 %v1219, 1.0
    %v1221 = vrcp.pop %v1220
    %v1222 = vmul.f32 1.0, %v1221
    %v1223 = vmul.f32 %v1222, %v258
    %v1224 = vsub.f32 %v1223, %v259
    %v1225 = vmul.f32 %v1224, %v1098
    %1227 = vrot.lane.b32.xlu0 %v1224, 64
    %v1228 = vpop.permute.xlu0 %1227
    %v1230 = vmul.f32 %v1224, %v1228
    %1232 = vrot.lane.b32.xlu0 %v1230, 32
    %v1233 = vpop.permute.xlu0 %1232
    %v1235 = vadd.f32 %v1225, %v1233
    %v1236 = vtanh.pop %v1235
    %1238 = vrot.lane.b32.xlu0 %v1236, 64
    %v1239 = vpop.permute.xlu0 %1238
    %v1241 = vmul.f32 %v1224, %v1239
    %1243 = vrot.lane.b32.xlu0 %v1241, 32
    %v1244 = vpop.permute.xlu0 %1243
    %1247 = vrot.lane.b32.xlu0 %v1214, 64
    %v1248 = vpop.permute.xlu0 %1247
    %v1250 = vsel %vm123, %v1244, %v1248
    %v1252 = vsel %vm291, %v1250, 0
    %1254 = vmatprep.subr.mxu0 %v26
    %1255 = vmatpush1.msra.mxu0 %v25
    %1256 = vmatprep.subr.mxu0 %v28
    %1257 = vmatpush1.msra.mxu0 %v27
    %1258 = vmatprep.subr.mxu0 %v30
    %1259 = vmatpush1.msra.mxu0 %v29
    %1260 = vmatprep.subr.mxu0 %v32
    %1261 = vmatpush1.msra.mxu0 %v31
    %1262 = vmatprep.subr.mxu0 %v34
    %1263 = vmatpush1.msra.mxu0 %v33
    %1264 = vmatprep.subr.mxu0 %v36
    %1265 = vmatpush1.msra.mxu0 %v35
    %1266 = vmatprep.subr.mxu0 %v38
    %1267 = vmatpush1.msra.mxu0 %v37
    %1268 = vmatprep.subr.mxu0 %v40
    %1269 = vmatpush1.msra.mxu0 %v39
    %1270 = vmatprep.subr.mxu0 0.0
    %1271 = vmatpush1.msra.mxu0 0.0
    %1272 = vmatprep.subr.mxu0 0.0
    %1273 = vmatpush1.msra.mxu0 0.0
    %1274 = vmatprep.subr.mxu0 0.0
    %1275 = vmatpush1.msra.mxu0 0.0
    %1276 = vmatprep.subr.mxu0 0.0
    %1277 = vmatpush1.msra.mxu0 0.0
    %1278 = vmatprep.subr.mxu0 0.0
    %1279 = vmatpush1.msra.mxu0 0.0
    %1280 = vmatprep.subr.mxu0 0.0
    %1281 = vmatpush1.msra.mxu0 0.0
    %1282 = vmatprep.subr.mxu0 0.0
    %1283 = vmatpush1.msra.mxu0 0.0
    %1284 = vmatprep.subr.mxu0 0.0
    %1285 = vmatpush1.msra.mxu0 0.0
    %1286 = vmatprep.subr.mxu0 0.0
    %1287 = vmatpush1.msra.mxu0 0.0
    %1288 = vmatprep.subr.mxu0 0.0
    %1289 = vmatpush1.msra.mxu0 0.0
    %1290 = vmatprep.subr.mxu0 0.0
    %1291 = vmatpush1.msra.mxu0 0.0
    %1292 = vmatprep.subr.mxu0 0.0
    %1293 = vmatpush1.msra.mxu0 0.0
    %1294 = vmatprep.subr.mxu0 0.0
    %1295 = vmatpush1.msra.mxu0 0.0
    %1296 = vmatprep.subr.mxu0 0.0
    %1297 = vmatpush1.msra.mxu0 0.0
    %1298 = vmatprep.subr.mxu0 0.0
    %1299 = vmatpush1.msra.mxu0 0.0
    %1300 = vmatprep.subr.mxu0 0.0
    %1301 = vmatpush1.msra.mxu0 0.0
    %1302 = vmatprep.subr.mxu0 0.0
    %1303 = vmatpush1.msra.mxu0 0.0
    %1304 = vmatprep.subr.mxu0 0.0
    %1305 = vmatpush1.msra.mxu0 0.0
    %1306 = vmatprep.subr.mxu0 0.0
    %1307 = vmatpush1.msra.mxu0 0.0
    %1308 = vmatprep.subr.mxu0 0.0
    %1309 = vmatpush1.msra.mxu0 0.0
    %1310 = vmatprep.subr.mxu0 0.0
    %1311 = vmatpush1.msra.mxu0 0.0
    %1312 = vmatprep.subr.mxu0 0.0
    %1313 = vmatpush1.msra.mxu0 0.0
    %1314 = vmatprep.subr.mxu0 0.0
    %1315 = vmatpush1.msra.mxu0 0.0
    %1316 = vmatprep.subr.mxu0 0.0
    %1317 = vmatpush1.msra.mxu0 0.0
    %1318 = vmatprep.mubr.f32.mxu0 0.0
    %1319 = vmatmul.mubr.f32.gmra.mrb[0].mxu0 %v1252
    %v1320 = vpop.f32.mrb[0].mxu0
    %v1321 = vpop.f32.mrb[0].mxu0
    %v1322 = vadd.f32 0.0, %v1321
    %1323 = vdwg.mxu0
    %v1324 = vadd.f32 %v1322, %v46
    %v1325 = vmul.f32 %v1324, %v258
    %v1326 = vxor.u32 %v1325, 2147483648
    %v1327 = vmul.f32 %v1326, 1.442695
    %v1328 = vpow.pop %v1327
    %v1329 = vadd.f32 %v1328, 1.0
    %v1330 = vrcp.pop %v1329
    %v1331 = vmul.f32 1.0, %v1330
    %v1332 = vmul.f32 %v1331, %v258
    %v1333 = vsub.f32 %v1332, %v259
    %v1334 = vmul.f32 %v1333, %v1208
    %1336 = vrot.lane.b32.xlu0 %v1333, 64
    %v1337 = vpop.permute.xlu0 %1336
    %v1339 = vmul.f32 %v1333, %v1337
    %1341 = vrot.lane.b32.xlu0 %v1339, 32
    %v1342 = vpop.permute.xlu0 %1341
    %v1344 = vadd.f32 %v1334, %v1342
    %v1345 = vtanh.pop %v1344
    %1347 = vrot.lane.b32.xlu0 %v1345, 64
    %v1348 = vpop.permute.xlu0 %1347
    %v1350 = vmul.f32 %v1333, %v1348
    %1352 = vrot.lane.b32.xlu0 %v1350, 64
    %v1353 = vpop.permute.xlu0 %1352
    %v1355 = vsel %vm123, %v1244, %v1353
    %v1356 = vmul.f32 %v1355, %v49
    %v1357 = vsel %vm291, %v1356, 0.0
    %1358 = vadd.xlane.f32.xlu0 %v1357
    %v1359 = vpop.xlane.xlu0 %1358
    %v1360 = vadd.f32 %v1359, %v50
    %vm1361 = vcmask 7168
    %1362 = vst.msk [vmem:[%s2] sm:$0xff] %vm1361, %v1360
    // Predicated region
    $region14: #{tpu_custom_call.1} parent=1 // pred_check
      _
    $region15: #{tpu_custom_call.1} parent=1 // pred_check_branch
      %1364 = sbr.rel (0) target = $region17
    $region16: #{tpu_custom_call.1} parent=1 // pred_region
      _
    $region17: #{tpu_custom_call.1} parent=1 // pred_fallthru
      _
    // Predicated region
    $region18: #{tpu_custom_call.1} parent=1 // pred_check
      _
    $region19: #{tpu_custom_call.1} parent=1 // pred_check_branch
      %1366 = sbr.rel (0) target = $region21
    $region20: #{tpu_custom_call.1} parent=1 // pred_region
      _
    $region21: #{tpu_custom_call.1} parent=1 // pred_fallthru
      _
    %1367 = vsyncpa [#allocation3], 1

</llo_original>
